<compile_context>
chip_gen: v5e
topology: v5e:2x2
jax: 0.10.0
libtpu: 0.0.40
codegen_flags: <defaults>
</compile_context>

<pallas_src>
import functools

import jax
import jax.numpy as jnp
from jax.experimental import pallas as pl
from jax.experimental.pallas import tpu as pltpu

_EPS = 1e-5  # nn.BatchNorm2d default eps

# Matmul operand dtype.  Kept f32 so the demo check against the f32 reference
# stays tight.
# TODO(synk): flip to jnp.bfloat16 on v6e/v7x production shapes (full-rate MXU,
# half the im2col bytes); keep BN/mask/ReLU math in f32 and loosen the check.
_MATMUL_DTYPE = jnp.float32


def _round_up(x, m):
    return ((x + m - 1) // m) * m


# ------------------------------ kernel helpers ------------------------------

def _zero_halos(bufs, c_used, *, PAD, HW):
    """Zero the flat halo columns and any unused sublane-pad channel rows.

    Runs every grid step (cheap relative to the HW interior) so the kernel is
    correct under dimension_semantics=("parallel",) megacore sharding.
    """
    for b in bufs:
        cp = b.shape[0]
        b[:, 0:PAD] = jnp.zeros((cp, PAD), jnp.float32)
        b[:, PAD + HW:PAD + HW + PAD] = jnp.zeros((cp, PAD), jnp.float32)
        if c_used < cp:                                     # static condition
            b[c_used:cp, PAD:PAD + HW] = jnp.zeros((cp - c_used, HW),
                                                   jnp.float32)


def _fill_buffers(bc, bl, br, rows, row0, *, W, PAD):
    """Write a (c, HW) channel slab into the center/left/right flat buffers.

    bl has column x == W-1 zeroed (feeds the kx=0 taps), br has column x == 0
    zeroed (kx=2 taps), so all 9 conv taps are pure lane offsets, no per-tap
    mask multiplies.
    """
    c, HW = rows.shape
    x_pos = jax.lax.broadcasted_iota(jnp.int32, (1, HW), 1) % W
    sl = slice(row0, row0 + c)
    bc[sl, PAD:PAD + HW] = rows
    bl[sl, PAD:PAD + HW] = jnp.where(x_pos != W - 1, rows, 0.0)
    br[sl, PAD:PAD + HW] = jnp.where(x_pos != 0, rows, 0.0)


def _conv3x3(bc, bl, br, w_ref, *, W, PAD, HW):
    """3x3 conv as 3 accumulating K=3*CinP matmuls (one per ky row shift)."""
    cinp = bc.shape[0]
    acc = None
    for ky in range(3):                                     # short fixed unroll
        off = PAD + (ky - 1) * W
        slab = jnp.concatenate(
            [bl[:, off - 1:off - 1 + HW],                   # kx=0 (reads x-1)
             bc[:, off:off + HW],                           # kx=1
             br[:, off + 1:off + 1 + HW]],                  # kx=2 (reads x+1)
            axis=0).astype(_MATMUL_DTYPE)                   # (3*CinP, HW)
        wk = w_ref[:, ky * 3 * cinp:(ky + 1) * 3 * cinp]    # (Cout, 3*CinP)
        d = jnp.dot(wk, slab, preferred_element_type=jnp.float32)
        acc = d if acc is None else acc + d
    return acc                                              # (Cout, HW) f32


# --------------------------------- kernels -----------------------------------

def _conv1_stats_kernel(x2_ref, x1_ref, w_ref, b_ref, y_ref, st_ref,
                        bc, bl, br, *, W, PAD):
    """conv1(+bias) of one image; emits per-image per-channel (sum, sumsq)."""
    C1, HW = x2_ref.shape[1], x2_ref.shape[2]
    _zero_halos((bc, bl, br), 2 * C1, PAD=PAD, HW=HW)
    # torch.cat([x2, x1], dim=1) folded into the shift-buffer fill.
    _fill_buffers(bc, bl, br, x2_ref[0], 0, W=W, PAD=PAD)
    _fill_buffers(bc, bl, br, x1_ref[0], C1, W=W, PAD=PAD)
    d = _conv3x3(bc, bl, br, w_ref, W=W, PAD=PAD, HW=HW)
    y_ref[0] = d + b_ref[...]
    # One-pass BN stats, shifted by the conv bias (sums of the pre-bias matmul
    # output) for f32 robustness.
    st_ref[0] = jnp.concatenate([jnp.sum(d, axis=-1, keepdims=True),
                                 jnp.sum(d * d, axis=-1, keepdims=True)],
                                axis=-1)


def _bnrelu_conv2_stats_kernel(y_ref, sc_ref, sh_ref, w_ref, b_ref,
                               z_ref, st_ref, bc, bl, br, *, W, PAD):
    """BN1+ReLU fused into the conv2 input path; conv2(+bias) + BN2 stats."""
    Cmid, HW = y_ref.shape[1], y_ref.shape[2]
    a = jnp.maximum(y_ref[0] * sc_ref[...] + sh_ref[...], 0.0)
    _zero_halos((bc, bl, br), Cmid, PAD=PAD, HW=HW)
    _fill_buffers(bc, bl, br, a, 0, W=W, PAD=PAD)
    d = _conv3x3(bc, bl, br, w_ref, W=W, PAD=PAD, HW=HW)
    z_ref[0] = d + b_ref[...]
    st_ref[0] = jnp.concatenate([jnp.sum(d, axis=-1, keepdims=True),
                                 jnp.sum(d * d, axis=-1, keepdims=True)],
                                axis=-1)


def _bn_relu_kernel(z_ref, sc_ref, sh_ref, o_ref):
    """BN2 + ReLU; rewrites the raw conv2 buffer in place (aliased output)."""
    o_ref[0] = jnp.maximum(z_ref[0] * sc_ref[...] + sh_ref[...], 0.0)


# ---------------------------- JAX glue (layout prep) -------------------------

def _interp_matrix(n_in, n_out):
    """Interpolation matrix for bilinear resize with align_corners=True."""
    if n_in == 1:
        return jnp.ones((n_out, 1), jnp.float32)
    pos = jnp.arange(n_out, dtype=jnp.float32) * (n_in - 1) / (n_out - 1)
    lo = jnp.clip(jnp.floor(pos).astype(jnp.int32), 0, n_in - 2)
    frac = pos - lo.astype(jnp.float32)
    m = jnp.zeros((n_out, n_in), jnp.float32)
    m = m.at[jnp.arange(n_out), lo].add(1.0 - frac)
    m = m.at[jnp.arange(n_out), lo + 1].add(frac)
    return m


def _bilinear_up2(x_nchw):
    n, c, h, w = x_nchw.shape
    mh = _interp_matrix(h, 2 * h)
    mw = _interp_matrix(w, 2 * w)
    return jnp.einsum("oh,nchw,pw->ncop", mh, x_nchw, mw)


def _pack_weights(w_hwio, cin, cin_p):
    """(3,3,Cin,Cout) -> (Cout, 9*CinP) packed (ky, kx, ci) to match im2col."""
    cout = w_hwio.shape[3]
    w = jnp.transpose(w_hwio, (3, 0, 1, 2)).astype(jnp.float32)
    w = jnp.pad(w, ((0, 0), (0, 0), (0, 0), (0, cin_p - cin)))
    return w.reshape(cout, 9 * cin_p).astype(_MATMUL_DTYPE)


def _bn_affine(stats, bias, gamma, beta, count):
    """Per-channel BN scale/shift from per-image (sum, sumsq) of pre-bias z."""
    st = jnp.sum(stats, axis=0)                     # (C, 2)
    mean_d = st[:, 0] / count
    var = jnp.maximum(st[:, 1] / count - mean_d * mean_d, 0.0)
    scale = gamma * jax.lax.rsqrt(var + _EPS)
    shift = beta - (mean_d + bias) * scale          # bias folded into shift
    return (scale.reshape(-1, 1).astype(jnp.float32),
            shift.reshape(-1, 1).astype(jnp.float32))


def _mosaic_params(vmem_need_bytes):
    limit = int(min(max(3 * vmem_need_bytes, 8 << 20), 64 << 20))
    return pltpu.CompilerParams(dimension_semantics=("parallel",),
                                vmem_limit_bytes=limit)


@jax.jit
def up_forward(x1, x2, p):
    """nn.Upsample(2x, bilinear, align_corners=True) + F.pad + cat + DoubleConv."""
    # TODO(synk): fuse the bilinear upsample + concat into the conv1 kernel to
    # avoid materializing x1u in HBM at production sizes.
    x1u = _bilinear_up2(x1.astype(jnp.float32))
    dy = x2.shape[2] - x1u.shape[2]
    dx = x2.shape[3] - x1u.shape[3]
    if dy or dx:                                    # no-op for exact 2x sizes
        x1u = jnp.pad(x1u, ((0, 0), (0, 0),
                            (dy // 2, dy - dy // 2),
                            (dx // 2, dx - dx // 2)))

    N, C1, H, W = x2.shape
    HW = H * W
    Cin, Cmid = p["w1"].shape[2], p["w1"].shape[3]
    Cout = p["w2"].shape[3]
    assert Cin == 2 * C1
    CinP = _round_up(Cin, 8)                        # sublane-aligned channels
    CmidP = _round_up(Cmid, 8)
    PAD = _round_up(W + 1, 128)                     # flat row-halo, lane-aligned
    buf_w = HW + 2 * PAD
    fcount = float(N * HW)
    itemsize = 4

    # Channels on sublanes, flat H*W on lanes (free reshapes).
    x2f = x2.reshape(N, C1, HW).astype(jnp.float32)
    x1f = x1u.reshape(N, C1, HW)
    w1r = _pack_weights(p["w1"], Cin, CinP)
    w2r = _pack_weights(p["w2"], Cmid, CmidP)
    col = lambda v: v.reshape(-1, 1).astype(jnp.float32)

    # ---- call 1: conv1 + per-image BN1 stats, grid over batch (parallel) ----
    vmem1 = (3 * CinP * buf_w + 3 * CinP * HW
             + 2 * (2 * C1 * HW + Cmid * HW) + Cmid * 9 * CinP) * itemsize
    y1, st1 = pl.pallas_call(
        functools.partial(_conv1_stats_kernel, W=W, PAD=PAD),
        grid=(N,),
        in_specs=[pl.BlockSpec((1, C1, HW), lambda n: (n, 0, 0)),
                  pl.BlockSpec((1, C1, HW), lambda n: (n, 0, 0)),
                  pl.BlockSpec((Cmid, 9 * CinP), lambda n: (0, 0)),
                  pl.BlockSpec((Cmid, 1), lambda n: (0, 0))],
        out_specs=(pl.BlockSpec((1, Cmid, HW), lambda n: (n, 0, 0)),
                   pl.BlockSpec((1, Cmid, 2), lambda n: (n, 0, 0))),
        out_shape=(jax.ShapeDtypeStruct((N, Cmid, HW), jnp.float32),
                   jax.ShapeDtypeStruct((N, Cmid, 2), jnp.float32)),
        scratch_shapes=[pltpu.VMEM((CinP, buf_w), jnp.float32)] * 3,
        compiler_params=_mosaic_params(vmem1),
    )(x2f, x1f, w1r, col(p["b1"]))

    scale1, shift1 = _bn_affine(st1, p["b1"], p["g1"], p["be1"], fcount)

    # ---- call 2: fused BN1+ReLU -> conv2 + per-image BN2 stats ----
    vmem2 = (3 * CmidP * buf_w + 3 * CmidP * HW
             + 2 * (Cmid * HW + Cout * HW) + Cout * 9 * CmidP) * itemsize
    z2, st2 = pl.pallas_call(
        functools.partial(_bnrelu_conv2_stats_kernel, W=W, PAD=PAD),
        grid=(N,),
        in_specs=[pl.BlockSpec((1, Cmid, HW), lambda n: (n, 0, 0)),
                  pl.BlockSpec((Cmid, 1), lambda n: (0, 0)),
                  pl.BlockSpec((Cmid, 1), lambda n: (0, 0)),
                  pl.BlockSpec((Cout, 9 * CmidP), lambda n: (0, 0)),
                  pl.BlockSpec((Cout, 1), lambda n: (0, 0))],
        out_specs=(pl.BlockSpec((1, Cout, HW), lambda n: (n, 0, 0)),
                   pl.BlockSpec((1, Cout, 2), lambda n: (n, 0, 0))),
        out_shape=(jax.ShapeDtypeStruct((N, Cout, HW), jnp.float32),
                   jax.ShapeDtypeStruct((N, Cout, 2), jnp.float32)),
        scratch_shapes=[pltpu.VMEM((CmidP, buf_w), jnp.float32)] * 3,
        compiler_params=_mosaic_params(vmem2),
    )(y1, scale1, shift1, w2r, col(p["b2"]))

    scale2, shift2 = _bn_affine(st2, p["b2"], p["g2"], p["be2"], fcount)

    # ---- call 3: BN2 + ReLU, in place over the raw conv2 buffer (aliased) ----
    vmem3 = (4 * Cout * HW) * itemsize
    out = pl.pallas_call(
        _bn_relu_kernel,
        grid=(N,),
        in_specs=[pl.BlockSpec((1, Cout, HW), lambda n: (n, 0, 0)),
                  pl.BlockSpec((Cout, 1), lambda n: (0, 0)),
                  pl.BlockSpec((Cout, 1), lambda n: (0, 0))],
        out_specs=pl.BlockSpec((1, Cout, HW), lambda n: (n, 0, 0)),
        out_shape=jax.ShapeDtypeStruct((N, Cout, HW), jnp.float32),
        input_output_aliases={0: 0},
        compiler_params=_mosaic_params(vmem3),
    )(z2, scale2, shift2)

    return out.reshape(N, Cout, H, W)


# ---------------------------- pure-JAX reference ----------------------------

def up_forward_reference(x1, x2, p):
    x1u = _bilinear_up2(x1.astype(jnp.float32))
    dy = x2.shape[2] - x1u.shape[2]
    dx = x2.shape[3] - x1u.shape[3]
    if dy or dx:
        x1u = jnp.pad(x1u, ((0, 0), (0, 0),
                            (dy // 2, dy - dy // 2),
                            (dx // 2, dx - dx // 2)))
    x = jnp.concatenate([x2.astype(jnp.float32), x1u], axis=1)

    def conv3x3(z, w_hwio, b):
        y = jax.lax.conv_general_dilated(
            z, w_hwio, window_strides=(1, 1), padding=((1, 1), (1, 1)),
            dimension_numbers=("NCHW", "HWIO", "NCHW"))
        return y + b.reshape(1, -1, 1, 1)

    def bn_relu(z, g, be):
        mean = jnp.mean(z, axis=(0, 2, 3), keepdims=True)
        var = jnp.mean((z - mean) ** 2, axis=(0, 2, 3), keepdims=True)
        zn = (z - mean) * jax.lax.rsqrt(var + _EPS)
        return jnp.maximum(zn * g.reshape(1, -1, 1, 1) + be.reshape(1, -1, 1, 1), 0.0)

    y = bn_relu(conv3x3(x, p["w1"], p["b1"]), p["g1"], p["be1"])
    y = bn_relu(conv3x3(y, p["w2"], p["b2"]), p["g2"], p["be2"])
    return y


if __name__ == "__main__":
    # Up(in_channels=8, out_channels=4, bilinear=True): x1 has in_channels//2
    # channels at half resolution, x2 has in_channels//2 channels at full res.
    in_channels, out_channels = 8, 4
    mid_channels = in_channels // 2
    N, H1, W1 = 2, 8, 8

    key = jax.random.PRNGKey(0)
    ks = jax.random.split(key, 10)
    params = {
        "w1": 0.2 * jax.random.normal(ks[0], (3, 3, in_channels, mid_channels), jnp.float32),
        "b1": 0.1 * jax.random.normal(ks[1], (mid_channels,), jnp.float32),
        "g1": 1.0 + 0.1 * jax.random.normal(ks[2], (mid_channels,), jnp.float32),
        "be1": 0.1 * jax.random.normal(ks[3], (mid_channels,), jnp.float32),
        "w2": 0.2 * jax.random.normal(ks[4], (3, 3, mid_channels, out_channels), jnp.float32),
        "b2": 0.1 * jax.random.normal(ks[5], (out_channels,), jnp.float32),
        "g2": 1.0 + 0.1 * jax.random.normal(ks[6], (out_channels,), jnp.float32),
        "be2": 0.1 * jax.random.normal(ks[7], (out_channels,), jnp.float32),
    }
    x1 = jax.random.normal(ks[8], (N, in_channels // 2, H1, W1), jnp.float32)
    x2 = jax.random.normal(ks[9], (N, in_channels // 2, 2 * H1, 2 * W1), jnp.float32)

    out = jax.block_until_ready(up_forward(x1, x2, params))
    ref = up_forward_reference(x1, x2, params)

    assert out.shape == (N, out_channels, 2 * H1, 2 * W1), out.shape
    err = float(jnp.max(jnp.abs(out - ref)))
    assert err < 2e-3, f"kernel/reference mismatch: max abs err = {err}"
    print("KERNEL_OK")
</pallas_src>

<mosaic_0001>
module attributes {stable_mosaic.version = 11 : i64} {
  func.func @_conv1_stats_kernel(%arg0: i32, %arg1: memref<1x4x256xf32, #tpu.memory_space<vmem>>, %arg2: memref<1x4x256xf32, #tpu.memory_space<vmem>>, %arg3: memref<4x72xf32, #tpu.memory_space<vmem>>, %arg4: memref<4x1xf32, #tpu.memory_space<vmem>>, %arg5: memref<1x4x256xf32, #tpu.memory_space<vmem>>, %arg6: memref<1x4x2xf32, #tpu.memory_space<vmem>>, %arg7: memref<8x512xf32, #tpu.memory_space<vmem>>, %arg8: memref<8x512xf32, #tpu.memory_space<vmem>>, %arg9: memref<8x512xf32, #tpu.memory_space<vmem>>) attributes {dimension_semantics = [#tpu.dimension_semantics<parallel>], iteration_bounds = array<i64: 2>, scalar_prefetch = 0 : i64, scratch_operands = 3 : i64, tpu.core_type = #tpu.core_type<tc>, window_params = [{transform_indices = @transform_0, window_bounds = array<i64: 1, 4, 256>}, {transform_indices = @transform_1, window_bounds = array<i64: 1, 4, 256>}, {pipeline_mode = #tpu.pipeline_mode<synchronous>, transform_indices = @transform_2, window_bounds = array<i64: 4, 72>}, {pipeline_mode = #tpu.pipeline_mode<synchronous>, transform_indices = @transform_3, window_bounds = array<i64: 4, 1>}, {transform_indices = @transform_4, window_bounds = array<i64: 1, 4, 256>}, {transform_indices = @transform_5, window_bounds = array<i64: 1, 4, 2>}]} {
    %cst = arith.constant 0.000000e+00 : f32
    %0 = vector.broadcast %cst : f32 to vector<8x128xf32>
    %c0 = arith.constant 0 : index
    %c0_0 = arith.constant 0 : index
    %1 = vector.load %arg7[%c0, %c0_0] : memref<8x512xf32, #tpu.memory_space<vmem>>, vector<8x128xf32>
    tpu.vector_store %arg7[%c0, %c0_0], %0 {strides = array<i32>} : memref<8x512xf32, #tpu.memory_space<vmem>>, vector<8x128xf32>,
    %cst_1 = arith.constant 0.000000e+00 : f32
    %2 = vector.broadcast %cst_1 : f32 to vector<8x128xf32>
    %c0_2 = arith.constant 0 : index
    %c384 = arith.constant 384 : index
    %3 = vector.load %arg7[%c0_2, %c384] : memref<8x512xf32, #tpu.memory_space<vmem>>, vector<8x128xf32>
    tpu.vector_store %arg7[%c0_2, %c384], %2 {strides = array<i32>} : memref<8x512xf32, #tpu.memory_space<vmem>>, vector<8x128xf32>,
    %cst_3 = arith.constant 0.000000e+00 : f32
    %4 = vector.broadcast %cst_3 : f32 to vector<8x128xf32>
    %c0_4 = arith.constant 0 : index
    %c0_5 = arith.constant 0 : index
    %5 = vector.load %arg8[%c0_4, %c0_5] : memref<8x512xf32, #tpu.memory_space<vmem>>, vector<8x128xf32>
    tpu.vector_store %arg8[%c0_4, %c0_5], %4 {strides = array<i32>} : memref<8x512xf32, #tpu.memory_space<vmem>>, vector<8x128xf32>,
    %cst_6 = arith.constant 0.000000e+00 : f32
    %6 = vector.broadcast %cst_6 : f32 to vector<8x128xf32>
    %c0_7 = arith.constant 0 : index
    %c384_8 = arith.constant 384 : index
    %7 = vector.load %arg8[%c0_7, %c384_8] : memref<8x512xf32, #tpu.memory_space<vmem>>, vector<8x128xf32>
    tpu.vector_store %arg8[%c0_7, %c384_8], %6 {strides = array<i32>} : memref<8x512xf32, #tpu.memory_space<vmem>>, vector<8x128xf32>,
    %cst_9 = arith.constant 0.000000e+00 : f32
    %8 = vector.broadcast %cst_9 : f32 to vector<8x128xf32>
    %c0_10 = arith.constant 0 : index
    %c0_11 = arith.constant 0 : index
    %9 = vector.load %arg9[%c0_10, %c0_11] : memref<8x512xf32, #tpu.memory_space<vmem>>, vector<8x128xf32>
    tpu.vector_store %arg9[%c0_10, %c0_11], %8 {strides = array<i32>} : memref<8x512xf32, #tpu.memory_space<vmem>>, vector<8x128xf32>,
    %cst_12 = arith.constant 0.000000e+00 : f32
    %10 = vector.broadcast %cst_12 : f32 to vector<8x128xf32>
    %c0_13 = arith.constant 0 : index
    %c384_14 = arith.constant 384 : index
    %11 = vector.load %arg9[%c0_13, %c384_14] : memref<8x512xf32, #tpu.memory_space<vmem>>, vector<8x128xf32>
    tpu.vector_store %arg9[%c0_13, %c384_14], %10 {strides = array<i32>} : memref<8x512xf32, #tpu.memory_space<vmem>>, vector<8x128xf32>,
    %c0_15 = arith.constant 0 : index
    %c0_16 = arith.constant 0 : index
    %c0_17 = arith.constant 0 : index
    %12 = vector.load %arg1[%c0_15, %c0_16, %c0_17] : memref<1x4x256xf32, #tpu.memory_space<vmem>>, vector<1x4x256xf32>
    %13 = vector.shape_cast %12 : vector<1x4x256xf32> to vector<4x256xf32>
    %14 = tpu.iota {dimensions = array<i32: 1>} : vector<1x256xi32>
    %c16_i32 = arith.constant 16 : i32
    %c0_i32 = arith.constant 0 : i32
    %15 = arith.cmpi eq, %c16_i32, %c0_i32 : i32
    %c1_i32 = arith.constant 1 : i32
    %16 = arith.select %15, %c1_i32, %c16_i32 : i32
    %17 = vector.broadcast %16 : i32 to vector<1x256xi32>
    %18 = arith.remsi %14, %17 : vector<1x256xi32>
    %c0_i32_18 = arith.constant 0 : i32
    %19 = vector.broadcast %c0_i32_18 : i32 to vector<1x256xi32>
    %20 = arith.cmpi ne, %18, %19 : vector<1x256xi32>
    %c0_i32_19 = arith.constant 0 : i32
    %21 = vector.broadcast %c0_i32_19 : i32 to vector<1x256xi32>
    %22 = arith.cmpi slt, %18, %21 : vector<1x256xi32>
    %c0_i32_20 = arith.constant 0 : i32
    %23 = arith.cmpi slt, %16, %c0_i32_20 : i32
    %24 = vector.broadcast %23 : i1 to vector<1x256xi1>
    %25 = vector.broadcast %24 : vector<1x256xi1> to vector<1x256xi1>
    %26 = arith.xori %22, %25 : vector<1x256xi1>
    %27 = arith.andi %26, %20 : vector<1x256xi1>
    %28 = vector.broadcast %16 : i32 to vector<1x256xi32>
    %29 = arith.addi %18, %28 : vector<1x256xi32>
    %30 = arith.select %27, %29, %18 : vector<1x256xi1>, vector<1x256xi32>
    %c0_21 = arith.constant 0 : index
    %c128 = arith.constant 128 : index
    %31 = vector.load %arg7[%c0_21, %c128] : memref<8x512xf32, #tpu.memory_space<vmem>>, vector<4x256xf32>
    tpu.vector_store %arg7[%c0_21, %c128], %13 {strides = array<i32>} : memref<8x512xf32, #tpu.memory_space<vmem>>, vector<4x256xf32>,
    %c15_i32 = arith.constant 15 : i32
    %32 = vector.broadcast %c15_i32 : i32 to vector<1x256xi32>
    %33 = arith.cmpi ne, %30, %32 : vector<1x256xi32>
    %cst_22 = arith.constant 0.000000e+00 : f32
    %34 = vector.shape_cast %33 : vector<1x256xi1> to vector<1x256xi1>
    %35 = vector.broadcast %34 : vector<1x256xi1> to vector<4x256xi1>
    %36 = vector.broadcast %cst_22 : f32 to vector<4x256xf32>
    %37 = arith.select %35, %13, %36 : vector<4x256xi1>, vector<4x256xf32>
    %c0_23 = arith.constant 0 : index
    %c128_24 = arith.constant 128 : index
    %38 = vector.load %arg8[%c0_23, %c128_24] : memref<8x512xf32, #tpu.memory_space<vmem>>, vector<4x256xf32>
    tpu.vector_store %arg8[%c0_23, %c128_24], %37 {strides = array<i32>} : memref<8x512xf32, #tpu.memory_space<vmem>>, vector<4x256xf32>,
    %c0_i32_25 = arith.constant 0 : i32
    %39 = vector.broadcast %c0_i32_25 : i32 to vector<1x256xi32>
    %40 = arith.cmpi ne, %30, %39 : vector<1x256xi32>
    %cst_26 = arith.constant 0.000000e+00 : f32
    %41 = vector.shape_cast %40 : vector<1x256xi1> to vector<1x256xi1>
    %42 = vector.broadcast %41 : vector<1x256xi1> to vector<4x256xi1>
    %43 = vector.broadcast %cst_26 : f32 to vector<4x256xf32>
    %44 = arith.select %42, %13, %43 : vector<4x256xi1>, vector<4x256xf32>
    %c0_27 = arith.constant 0 : index
    %c128_28 = arith.constant 128 : index
    %45 = vector.load %arg9[%c0_27, %c128_28] : memref<8x512xf32, #tpu.memory_space<vmem>>, vector<4x256xf32>
    tpu.vector_store %arg9[%c0_27, %c128_28], %44 {strides = array<i32>} : memref<8x512xf32, #tpu.memory_space<vmem>>, vector<4x256xf32>,
    %c0_29 = arith.constant 0 : index
    %c0_30 = arith.constant 0 : index
    %c0_31 = arith.constant 0 : index
    %46 = vector.load %arg2[%c0_29, %c0_30, %c0_31] : memref<1x4x256xf32, #tpu.memory_space<vmem>>, vector<1x4x256xf32>
    %47 = vector.shape_cast %46 : vector<1x4x256xf32> to vector<4x256xf32>
    %48 = tpu.iota {dimensions = array<i32: 1>} : vector<1x256xi32>
    %c16_i32_32 = arith.constant 16 : i32
    %c0_i32_33 = arith.constant 0 : i32
    %49 = arith.cmpi eq, %c16_i32_32, %c0_i32_33 : i32
    %c1_i32_34 = arith.constant 1 : i32
    %50 = arith.select %49, %c1_i32_34, %c16_i32_32 : i32
    %51 = vector.broadcast %50 : i32 to vector<1x256xi32>
    %52 = arith.remsi %48, %51 : vector<1x256xi32>
    %c0_i32_35 = arith.constant 0 : i32
    %53 = vector.broadcast %c0_i32_35 : i32 to vector<1x256xi32>
    %54 = arith.cmpi ne, %52, %53 : vector<1x256xi32>
    %c0_i32_36 = arith.constant 0 : i32
    %55 = vector.broadcast %c0_i32_36 : i32 to vector<1x256xi32>
    %56 = arith.cmpi slt, %52, %55 : vector<1x256xi32>
    %c0_i32_37 = arith.constant 0 : i32
    %57 = arith.cmpi slt, %50, %c0_i32_37 : i32
    %58 = vector.broadcast %57 : i1 to vector<1x256xi1>
    %59 = vector.broadcast %58 : vector<1x256xi1> to vector<1x256xi1>
    %60 = arith.xori %56, %59 : vector<1x256xi1>
    %61 = arith.andi %60, %54 : vector<1x256xi1>
    %62 = vector.broadcast %50 : i32 to vector<1x256xi32>
    %63 = arith.addi %52, %62 : vector<1x256xi32>
    %64 = arith.select %61, %63, %52 : vector<1x256xi1>, vector<1x256xi32>
    %c4 = arith.constant 4 : index
    %c128_38 = arith.constant 128 : index
    %65 = vector.load %arg7[%c4, %c128_38] : memref<8x512xf32, #tpu.memory_space<vmem>>, vector<4x256xf32>
    tpu.vector_store %arg7[%c4, %c128_38], %47 {strides = array<i32>} : memref<8x512xf32, #tpu.memory_space<vmem>>, vector<4x256xf32>,
    %c15_i32_39 = arith.constant 15 : i32
    %66 = vector.broadcast %c15_i32_39 : i32 to vector<1x256xi32>
    %67 = arith.cmpi ne, %64, %66 : vector<1x256xi32>
    %cst_40 = arith.constant 0.000000e+00 : f32
    %68 = vector.shape_cast %67 : vector<1x256xi1> to vector<1x256xi1>
    %69 = vector.broadcast %68 : vector<1x256xi1> to vector<4x256xi1>
    %70 = vector.broadcast %cst_40 : f32 to vector<4x256xf32>
    %71 = arith.select %69, %47, %70 : vector<4x256xi1>, vector<4x256xf32>
    %c4_41 = arith.constant 4 : index
    %c128_42 = arith.constant 128 : index
    %72 = vector.load %arg8[%c4_41, %c128_42] : memref<8x512xf32, #tpu.memory_space<vmem>>, vector<4x256xf32>
    tpu.vector_store %arg8[%c4_41, %c128_42], %71 {strides = array<i32>} : memref<8x512xf32, #tpu.memory_space<vmem>>, vector<4x256xf32>,
    %c0_i32_43 = arith.constant 0 : i32
    %73 = vector.broadcast %c0_i32_43 : i32 to vector<1x256xi32>
    %74 = arith.cmpi ne, %64, %73 : vector<1x256xi32>
    %cst_44 = arith.constant 0.000000e+00 : f32
    %75 = vector.shape_cast %74 : vector<1x256xi1> to vector<1x256xi1>
    %76 = vector.broadcast %75 : vector<1x256xi1> to vector<4x256xi1>
    %77 = vector.broadcast %cst_44 : f32 to vector<4x256xf32>
    %78 = arith.select %76, %47, %77 : vector<4x256xi1>, vector<4x256xf32>
    %c4_45 = arith.constant 4 : index
    %c128_46 = arith.constant 128 : index
    %79 = vector.load %arg9[%c4_45, %c128_46] : memref<8x512xf32, #tpu.memory_space<vmem>>, vector<4x256xf32>
    tpu.vector_store %arg9[%c4_45, %c128_46], %78 {strides = array<i32>} : memref<8x512xf32, #tpu.memory_space<vmem>>, vector<4x256xf32>,
    %c0_47 = arith.constant 0 : index
    %c111 = arith.constant 111 : index
    %80 = vector.load %arg8[%c0_47, %c111] : memref<8x512xf32, #tpu.memory_space<vmem>>, vector<8x256xf32>
    %c0_48 = arith.constant 0 : index
    %c112 = arith.constant 112 : index
    %81 = vector.load %arg7[%c0_48, %c112] : memref<8x512xf32, #tpu.memory_space<vmem>>, vector<8x256xf32>
    %c0_49 = arith.constant 0 : index
    %c113 = arith.constant 113 : index
    %82 = vector.load %arg9[%c0_49, %c113] : memref<8x512xf32, #tpu.memory_space<vmem>>, vector<8x256xf32>
    %83 = tpu.concatenate %80, %81, %82 in 0 : vector<8x256xf32>, vector<8x256xf32>, vector<8x256xf32> -> vector<24x256xf32>
    %c0_50 = arith.constant 0 : index
    %c0_51 = arith.constant 0 : index
    %84 = vector.load %arg3[%c0_50, %c0_51] : memref<4x72xf32, #tpu.memory_space<vmem>>, vector<4x24xf32>
    %cst_52 = arith.constant dense<0.000000e+00> : vector<4x256xf32>
    %85 = tpu.matmul %84, %83, %cst_52 {dimension_numbers = #tpu.dot_dimension_numbers<[1], [0], [0], [1], [0, 0, 1, 1], [], []>} : vector<4x24xf32>, vector<24x256xf32>, vector<4x256xf32> -> vector<4x256xf32>
    %c0_53 = arith.constant 0 : index
    %c127 = arith.constant 127 : index
    %86 = vector.load %arg8[%c0_53, %c127] : memref<8x512xf32, #tpu.memory_space<vmem>>, vector<8x256xf32>
    %c0_54 = arith.constant 0 : index
    %c128_55 = arith.constant 128 : index
    %87 = vector.load %arg7[%c0_54, %c128_55] : memref<8x512xf32, #tpu.memory_space<vmem>>, vector<8x256xf32>
    %c0_56 = arith.constant 0 : index
    %c129 = arith.constant 129 : index
    %88 = vector.load %arg9[%c0_56, %c129] : memref<8x512xf32, #tpu.memory_space<vmem>>, vector<8x256xf32>
    %89 = tpu.concatenate %86, %87, %88 in 0 : vector<8x256xf32>, vector<8x256xf32>, vector<8x256xf32> -> vector<24x256xf32>
    %c0_57 = arith.constant 0 : index
    %c24 = arith.constant 24 : index
    %90 = vector.load %arg3[%c0_57, %c24] : memref<4x72xf32, #tpu.memory_space<vmem>>, vector<4x24xf32>
    %cst_58 = arith.constant dense<0.000000e+00> : vector<4x256xf32>
    %91 = tpu.matmul %90, %89, %cst_58 {dimension_numbers = #tpu.dot_dimension_numbers<[1], [0], [0], [1], [0, 0, 1, 1], [], []>} : vector<4x24xf32>, vector<24x256xf32>, vector<4x256xf32> -> vector<4x256xf32>
    %92 = arith.addf %85, %91 : vector<4x256xf32>
    %c0_59 = arith.constant 0 : index
    %c143 = arith.constant 143 : index
    %93 = vector.load %arg8[%c0_59, %c143] : memref<8x512xf32, #tpu.memory_space<vmem>>, vector<8x256xf32>
    %c0_60 = arith.constant 0 : index
    %c144 = arith.constant 144 : index
    %94 = vector.load %arg7[%c0_60, %c144] : memref<8x512xf32, #tpu.memory_space<vmem>>, vector<8x256xf32>
    %c0_61 = arith.constant 0 : index
    %c145 = arith.constant 145 : index
    %95 = vector.load %arg9[%c0_61, %c145] : memref<8x512xf32, #tpu.memory_space<vmem>>, vector<8x256xf32>
    %96 = tpu.concatenate %93, %94, %95 in 0 : vector<8x256xf32>, vector<8x256xf32>, vector<8x256xf32> -> vector<24x256xf32>
    %c0_62 = arith.constant 0 : index
    %c48 = arith.constant 48 : index
    %97 = vector.load %arg3[%c0_62, %c48] : memref<4x72xf32, #tpu.memory_space<vmem>>, vector<4x24xf32>
    %cst_63 = arith.constant dense<0.000000e+00> : vector<4x256xf32>
    %98 = tpu.matmul %97, %96, %cst_63 {dimension_numbers = #tpu.dot_dimension_numbers<[1], [0], [0], [1], [0, 0, 1, 1], [], []>} : vector<4x24xf32>, vector<24x256xf32>, vector<4x256xf32> -> vector<4x256xf32>
    %99 = arith.addf %92, %98 : vector<4x256xf32>
    %c0_64 = arith.constant 0 : index
    %c0_65 = arith.constant 0 : index
    %100 = vector.load %arg4[%c0_64, %c0_65] : memref<4x1xf32, #tpu.memory_space<vmem>>, vector<4x1xf32>
    %101 = vector.broadcast %100 : vector<4x1xf32> to vector<4x256xf32>
    %102 = arith.addf %99, %101 : vector<4x256xf32>
    %c0_66 = arith.constant 0 : index
    %c0_67 = arith.constant 0 : index
    %c0_68 = arith.constant 0 : index
    %103 = vector.load %arg5[%c0_66, %c0_67, %c0_68] : memref<1x4x256xf32, #tpu.memory_space<vmem>>, vector<1x4x256xf32>
    %104 = vector.shape_cast %103 : vector<1x4x256xf32> to vector<4x256xf32>
    %105 = vector.shape_cast %102 : vector<4x256xf32> to vector<1x4x256xf32>
    tpu.vector_store %arg5[%c0_66, %c0_67, %c0_68], %105 {strides = array<i32>} : memref<1x4x256xf32, #tpu.memory_space<vmem>>, vector<1x4x256xf32>,
    %cst_69 = arith.constant dense<0.000000e+00> : vector<4xf32>
    %106 = vector.multi_reduction <add>, %99, %cst_69 [1] : vector<4x256xf32> to vector<4xf32>
    %107 = vector.shape_cast %106 : vector<4xf32> to vector<4x1xf32>
    %108 = arith.mulf %99, %99 : vector<4x256xf32>
    %cst_70 = arith.constant dense<0.000000e+00> : vector<4xf32>
    %109 = vector.multi_reduction <add>, %108, %cst_70 [1] : vector<4x256xf32> to vector<4xf32>
    %110 = vector.shape_cast %109 : vector<4xf32> to vector<4x1xf32>
    %111 = tpu.concatenate %107, %110 in 1 : vector<4x1xf32>, vector<4x1xf32> -> vector<4x2xf32>
    %c0_71 = arith.constant 0 : index
    %c0_72 = arith.constant 0 : index
    %c0_73 = arith.constant 0 : index
    %112 = vector.load %arg6[%c0_71, %c0_72, %c0_73] : memref<1x4x2xf32, #tpu.memory_space<vmem>>, vector<1x4x2xf32>
    %113 = vector.shape_cast %112 : vector<1x4x2xf32> to vector<4x2xf32>
    %114 = vector.shape_cast %111 : vector<4x2xf32> to vector<1x4x2xf32>
    tpu.vector_store %arg6[%c0_71, %c0_72, %c0_73], %114 {strides = array<i32>} : memref<1x4x2xf32, #tpu.memory_space<vmem>>, vector<1x4x2xf32>,
    return
  }
  func.func @transform_0(%arg0: i32) -> (i32, i32, i32) {
    %c0_i32 = arith.constant 0 : i32
    %c0_i32_0 = arith.constant 0 : i32
    %c0_i32_1 = arith.constant 0 : i32
    return %arg0, %c0_i32, %c0_i32_0 : i32, i32, i32
  }
  func.func @transform_1(%arg0: i32) -> (i32, i32, i32) {
    %c0_i32 = arith.constant 0 : i32
    %c0_i32_0 = arith.constant 0 : i32
    %c0_i32_1 = arith.constant 0 : i32
    return %arg0, %c0_i32, %c0_i32_0 : i32, i32, i32
  }
  func.func @transform_2(%arg0: i32) -> (i32, i32) {
    %c0_i32 = arith.constant 0 : i32
    %c0_i32_0 = arith.constant 0 : i32
    %c0_i32_1 = arith.constant 0 : i32
    return %c0_i32, %c0_i32_0 : i32, i32
  }
  func.func @transform_3(%arg0: i32) -> (i32, i32) {
    %c0_i32 = arith.constant 0 : i32
    %c0_i32_0 = arith.constant 0 : i32
    %c0_i32_1 = arith.constant 0 : i32
    return %c0_i32, %c0_i32_0 : i32, i32
  }
  func.func @transform_4(%arg0: i32) -> (i32, i32, i32) {
    %c0_i32 = arith.constant 0 : i32
    %c0_i32_0 = arith.constant 0 : i32
    %c0_i32_1 = arith.constant 0 : i32
    return %arg0, %c0_i32, %c0_i32_0 : i32, i32, i32
  }
  func.func @transform_5(%arg0: i32) -> (i32, i32, i32) {
    %c0_i32 = arith.constant 0 : i32
    %c0_i32_0 = arith.constant 0 : i32
    %c0_i32_1 = arith.constant 0 : i32
    return %arg0, %c0_i32, %c0_i32_0 : i32, i32, i32
  }
}

module attributes {stable_mosaic.version = 11 : i64} {
  func.func @_bn_relu_kernel(%arg0: i32, %arg1: memref<1x4x256xf32, #tpu.memory_space<vmem>>, %arg2: memref<4x1xf32, #tpu.memory_space<vmem>>, %arg3: memref<4x1xf32, #tpu.memory_space<vmem>>, %arg4: memref<1x4x256xf32, #tpu.memory_space<vmem>>) attributes {dimension_semantics = [#tpu.dimension_semantics<parallel>], iteration_bounds = array<i64: 2>, scalar_prefetch = 0 : i64, scratch_operands = 0 : i64, tpu.core_type = #tpu.core_type<tc>, window_params = [{transform_indices = @transform_0, window_bounds = array<i64: 1, 4, 256>}, {pipeline_mode = #tpu.pipeline_mode<synchronous>, transform_indices = @transform_1, window_bounds = array<i64: 4, 1>}, {pipeline_mode = #tpu.pipeline_mode<synchronous>, transform_indices = @transform_2, window_bounds = array<i64: 4, 1>}, {transform_indices = @transform_3, window_bounds = array<i64: 1, 4, 256>}]} {
    %c0 = arith.constant 0 : index
    %c0_0 = arith.constant 0 : index
    %c0_1 = arith.constant 0 : index
    %0 = vector.load %arg1[%c0, %c0_0, %c0_1] : memref<1x4x256xf32, #tpu.memory_space<vmem>>, vector<1x4x256xf32>
    %1 = vector.shape_cast %0 : vector<1x4x256xf32> to vector<4x256xf32>
    %c0_2 = arith.constant 0 : index
    %c0_3 = arith.constant 0 : index
    %2 = vector.load %arg2[%c0_2, %c0_3] : memref<4x1xf32, #tpu.memory_space<vmem>>, vector<4x1xf32>
    %3 = vector.broadcast %2 : vector<4x1xf32> to vector<4x256xf32>
    %4 = arith.mulf %1, %3 : vector<4x256xf32>
    %c0_4 = arith.constant 0 : index
    %c0_5 = arith.constant 0 : index
    %5 = vector.load %arg3[%c0_4, %c0_5] : memref<4x1xf32, #tpu.memory_space<vmem>>, vector<4x1xf32>
    %6 = vector.broadcast %5 : vector<4x1xf32> to vector<4x256xf32>
    %7 = arith.addf %4, %6 : vector<4x256xf32>
    %cst = arith.constant 0.000000e+00 : f32
    %8 = vector.broadcast %cst : f32 to vector<4x256xf32>
    %9 = arith.maximumf %7, %8 : vector<4x256xf32>
    %c0_6 = arith.constant 0 : index
    %c0_7 = arith.constant 0 : index
    %c0_8 = arith.constant 0 : index
    %10 = vector.load %arg4[%c0_6, %c0_7, %c0_8] : memref<1x4x256xf32, #tpu.memory_space<vmem>>, vector<1x4x256xf32>
    %11 = vector.shape_cast %10 : vector<1x4x256xf32> to vector<4x256xf32>
    %12 = vector.shape_cast %9 : vector<4x256xf32> to vector<1x4x256xf32>
    tpu.vector_store %arg4[%c0_6, %c0_7, %c0_8], %12 {strides = array<i32>} : memref<1x4x256xf32, #tpu.memory_space<vmem>>, vector<1x4x256xf32>,
    return
  }
  func.func @transform_0(%arg0: i32) -> (i32, i32, i32) {
    %c0_i32 = arith.constant 0 : i32
    %c0_i32_0 = arith.constant 0 : i32
    %c0_i32_1 = arith.constant 0 : i32
    return %arg0, %c0_i32, %c0_i32_0 : i32, i32, i32
  }
  func.func @transform_1(%arg0: i32) -> (i32, i32) {
    %c0_i32 = arith.constant 0 : i32
    %c0_i32_0 = arith.constant 0 : i32
    %c0_i32_1 = arith.constant 0 : i32
    return %c0_i32, %c0_i32_0 : i32, i32
  }
  func.func @transform_2(%arg0: i32) -> (i32, i32) {
    %c0_i32 = arith.constant 0 : i32
    %c0_i32_0 = arith.constant 0 : i32
    %c0_i32_1 = arith.constant 0 : i32
    return %c0_i32, %c0_i32_0 : i32, i32
  }
  func.func @transform_3(%arg0: i32) -> (i32, i32, i32) {
    %c0_i32 = arith.constant 0 : i32
    %c0_i32_0 = arith.constant 0 : i32
    %c0_i32_1 = arith.constant 0 : i32
    return %arg0, %c0_i32, %c0_i32_0 : i32, i32, i32
  }
}

module attributes {stable_mosaic.version = 11 : i64} {
  func.func @_bnrelu_conv2_stats_kernel(%arg0: i32, %arg1: memref<1x4x256xf32, #tpu.memory_space<vmem>>, %arg2: memref<4x1xf32, #tpu.memory_space<vmem>>, %arg3: memref<4x1xf32, #tpu.memory_space<vmem>>, %arg4: memref<4x72xf32, #tpu.memory_space<vmem>>, %arg5: memref<4x1xf32, #tpu.memory_space<vmem>>, %arg6: memref<1x4x256xf32, #tpu.memory_space<vmem>>, %arg7: memref<1x4x2xf32, #tpu.memory_space<vmem>>, %arg8: memref<8x512xf32, #tpu.memory_space<vmem>>, %arg9: memref<8x512xf32, #tpu.memory_space<vmem>>, %arg10: memref<8x512xf32, #tpu.memory_space<vmem>>) attributes {dimension_semantics = [#tpu.dimension_semantics<parallel>], iteration_bounds = array<i64: 2>, scalar_prefetch = 0 : i64, scratch_operands = 3 : i64, tpu.core_type = #tpu.core_type<tc>, window_params = [{transform_indices = @transform_0, window_bounds = array<i64: 1, 4, 256>}, {pipeline_mode = #tpu.pipeline_mode<synchronous>, transform_indices = @transform_1, window_bounds = array<i64: 4, 1>}, {pipeline_mode = #tpu.pipeline_mode<synchronous>, transform_indices = @transform_2, window_bounds = array<i64: 4, 1>}, {pipeline_mode = #tpu.pipeline_mode<synchronous>, transform_indices = @transform_3, window_bounds = array<i64: 4, 72>}, {pipeline_mode = #tpu.pipeline_mode<synchronous>, transform_indices = @transform_4, window_bounds = array<i64: 4, 1>}, {transform_indices = @transform_5, window_bounds = array<i64: 1, 4, 256>}, {transform_indices = @transform_6, window_bounds = array<i64: 1, 4, 2>}]} {
    %c0 = arith.constant 0 : index
    %c0_0 = arith.constant 0 : index
    %c0_1 = arith.constant 0 : index
    %0 = vector.load %arg1[%c0, %c0_0, %c0_1] : memref<1x4x256xf32, #tpu.memory_space<vmem>>, vector<1x4x256xf32>
    %1 = vector.shape_cast %0 : vector<1x4x256xf32> to vector<4x256xf32>
    %c0_2 = arith.constant 0 : index
    %c0_3 = arith.constant 0 : index
    %2 = vector.load %arg2[%c0_2, %c0_3] : memref<4x1xf32, #tpu.memory_space<vmem>>, vector<4x1xf32>
    %3 = vector.broadcast %2 : vector<4x1xf32> to vector<4x256xf32>
    %4 = arith.mulf %1, %3 : vector<4x256xf32>
    %c0_4 = arith.constant 0 : index
    %c0_5 = arith.constant 0 : index
    %5 = vector.load %arg3[%c0_4, %c0_5] : memref<4x1xf32, #tpu.memory_space<vmem>>, vector<4x1xf32>
    %6 = vector.broadcast %5 : vector<4x1xf32> to vector<4x256xf32>
    %7 = arith.addf %4, %6 : vector<4x256xf32>
    %cst = arith.constant 0.000000e+00 : f32
    %8 = vector.broadcast %cst : f32 to vector<4x256xf32>
    %9 = arith.maximumf %7, %8 : vector<4x256xf32>
    %cst_6 = arith.constant 0.000000e+00 : f32
    %10 = vector.broadcast %cst_6 : f32 to vector<8x128xf32>
    %c0_7 = arith.constant 0 : index
    %c0_8 = arith.constant 0 : index
    %11 = vector.load %arg8[%c0_7, %c0_8] : memref<8x512xf32, #tpu.memory_space<vmem>>, vector<8x128xf32>
    tpu.vector_store %arg8[%c0_7, %c0_8], %10 {strides = array<i32>} : memref<8x512xf32, #tpu.memory_space<vmem>>, vector<8x128xf32>,
    %cst_9 = arith.constant 0.000000e+00 : f32
    %12 = vector.broadcast %cst_9 : f32 to vector<8x128xf32>
    %c0_10 = arith.constant 0 : index
    %c384 = arith.constant 384 : index
    %13 = vector.load %arg8[%c0_10, %c384] : memref<8x512xf32, #tpu.memory_space<vmem>>, vector<8x128xf32>
    tpu.vector_store %arg8[%c0_10, %c384], %12 {strides = array<i32>} : memref<8x512xf32, #tpu.memory_space<vmem>>, vector<8x128xf32>,
    %cst_11 = arith.constant 0.000000e+00 : f32
    %14 = vector.broadcast %cst_11 : f32 to vector<4x256xf32>
    %c4 = arith.constant 4 : index
    %c128 = arith.constant 128 : index
    %15 = vector.load %arg8[%c4, %c128] : memref<8x512xf32, #tpu.memory_space<vmem>>, vector<4x256xf32>
    tpu.vector_store %arg8[%c4, %c128], %14 {strides = array<i32>} : memref<8x512xf32, #tpu.memory_space<vmem>>, vector<4x256xf32>,
    %cst_12 = arith.constant 0.000000e+00 : f32
    %16 = vector.broadcast %cst_12 : f32 to vector<8x128xf32>
    %c0_13 = arith.constant 0 : index
    %c0_14 = arith.constant 0 : index
    %17 = vector.load %arg9[%c0_13, %c0_14] : memref<8x512xf32, #tpu.memory_space<vmem>>, vector<8x128xf32>
    tpu.vector_store %arg9[%c0_13, %c0_14], %16 {strides = array<i32>} : memref<8x512xf32, #tpu.memory_space<vmem>>, vector<8x128xf32>,
    %cst_15 = arith.constant 0.000000e+00 : f32
    %18 = vector.broadcast %cst_15 : f32 to vector<8x128xf32>
    %c0_16 = arith.constant 0 : index
    %c384_17 = arith.constant 384 : index
    %19 = vector.load %arg9[%c0_16, %c384_17] : memref<8x512xf32, #tpu.memory_space<vmem>>, vector<8x128xf32>
    tpu.vector_store %arg9[%c0_16, %c384_17], %18 {strides = array<i32>} : memref<8x512xf32, #tpu.memory_space<vmem>>, vector<8x128xf32>,
    %cst_18 = arith.constant 0.000000e+00 : f32
    %20 = vector.broadcast %cst_18 : f32 to vector<4x256xf32>
    %c4_19 = arith.constant 4 : index
    %c128_20 = arith.constant 128 : index
    %21 = vector.load %arg9[%c4_19, %c128_20] : memref<8x512xf32, #tpu.memory_space<vmem>>, vector<4x256xf32>
    tpu.vector_store %arg9[%c4_19, %c128_20], %20 {strides = array<i32>} : memref<8x512xf32, #tpu.memory_space<vmem>>, vector<4x256xf32>,
    %cst_21 = arith.constant 0.000000e+00 : f32
    %22 = vector.broadcast %cst_21 : f32 to vector<8x128xf32>
    %c0_22 = arith.constant 0 : index
    %c0_23 = arith.constant 0 : index
    %23 = vector.load %arg10[%c0_22, %c0_23] : memref<8x512xf32, #tpu.memory_space<vmem>>, vector<8x128xf32>
    tpu.vector_store %arg10[%c0_22, %c0_23], %22 {strides = array<i32>} : memref<8x512xf32, #tpu.memory_space<vmem>>, vector<8x128xf32>,
    %cst_24 = arith.constant 0.000000e+00 : f32
    %24 = vector.broadcast %cst_24 : f32 to vector<8x128xf32>
    %c0_25 = arith.constant 0 : index
    %c384_26 = arith.constant 384 : index
    %25 = vector.load %arg10[%c0_25, %c384_26] : memref<8x512xf32, #tpu.memory_space<vmem>>, vector<8x128xf32>
    tpu.vector_store %arg10[%c0_25, %c384_26], %24 {strides = array<i32>} : memref<8x512xf32, #tpu.memory_space<vmem>>, vector<8x128xf32>,
    %cst_27 = arith.constant 0.000000e+00 : f32
    %26 = vector.broadcast %cst_27 : f32 to vector<4x256xf32>
    %c4_28 = arith.constant 4 : index
    %c128_29 = arith.constant 128 : index
    %27 = vector.load %arg10[%c4_28, %c128_29] : memref<8x512xf32, #tpu.memory_space<vmem>>, vector<4x256xf32>
    tpu.vector_store %arg10[%c4_28, %c128_29], %26 {strides = array<i32>} : memref<8x512xf32, #tpu.memory_space<vmem>>, vector<4x256xf32>,
    %28 = tpu.iota {dimensions = array<i32: 1>} : vector<1x256xi32>
    %c16_i32 = arith.constant 16 : i32
    %c0_i32 = arith.constant 0 : i32
    %29 = arith.cmpi eq, %c16_i32, %c0_i32 : i32
    %c1_i32 = arith.constant 1 : i32
    %30 = arith.select %29, %c1_i32, %c16_i32 : i32
    %31 = vector.broadcast %30 : i32 to vector<1x256xi32>
    %32 = arith.remsi %28, %31 : vector<1x256xi32>
    %c0_i32_30 = arith.constant 0 : i32
    %33 = vector.broadcast %c0_i32_30 : i32 to vector<1x256xi32>
    %34 = arith.cmpi ne, %32, %33 : vector<1x256xi32>
    %c0_i32_31 = arith.constant 0 : i32
    %35 = vector.broadcast %c0_i32_31 : i32 to vector<1x256xi32>
    %36 = arith.cmpi slt, %32, %35 : vector<1x256xi32>
    %c0_i32_32 = arith.constant 0 : i32
    %37 = arith.cmpi slt, %30, %c0_i32_32 : i32
    %38 = vector.broadcast %37 : i1 to vector<1x256xi1>
    %39 = vector.broadcast %38 : vector<1x256xi1> to vector<1x256xi1>
    %40 = arith.xori %36, %39 : vector<1x256xi1>
    %41 = arith.andi %40, %34 : vector<1x256xi1>
    %42 = vector.broadcast %30 : i32 to vector<1x256xi32>
    %43 = arith.addi %32, %42 : vector<1x256xi32>
    %44 = arith.select %41, %43, %32 : vector<1x256xi1>, vector<1x256xi32>
    %c0_33 = arith.constant 0 : index
    %c128_34 = arith.constant 128 : index
    %45 = vector.load %arg8[%c0_33, %c128_34] : memref<8x512xf32, #tpu.memory_space<vmem>>, vector<4x256xf32>
    tpu.vector_store %arg8[%c0_33, %c128_34], %9 {strides = array<i32>} : memref<8x512xf32, #tpu.memory_space<vmem>>, vector<4x256xf32>,
    %c15_i32 = arith.constant 15 : i32
    %46 = vector.broadcast %c15_i32 : i32 to vector<1x256xi32>
    %47 = arith.cmpi ne, %44, %46 : vector<1x256xi32>
    %cst_35 = arith.constant 0.000000e+00 : f32
    %48 = vector.shape_cast %47 : vector<1x256xi1> to vector<1x256xi1>
    %49 = vector.broadcast %48 : vector<1x256xi1> to vector<4x256xi1>
    %50 = vector.broadcast %cst_35 : f32 to vector<4x256xf32>
    %51 = arith.select %49, %9, %50 : vector<4x256xi1>, vector<4x256xf32>
    %c0_36 = arith.constant 0 : index
    %c128_37 = arith.constant 128 : index
    %52 = vector.load %arg9[%c0_36, %c128_37] : memref<8x512xf32, #tpu.memory_space<vmem>>, vector<4x256xf32>
    tpu.vector_store %arg9[%c0_36, %c128_37], %51 {strides = array<i32>} : memref<8x512xf32, #tpu.memory_space<vmem>>, vector<4x256xf32>,
    %c0_i32_38 = arith.constant 0 : i32
    %53 = vector.broadcast %c0_i32_38 : i32 to vector<1x256xi32>
    %54 = arith.cmpi ne, %44, %53 : vector<1x256xi32>
    %cst_39 = arith.constant 0.000000e+00 : f32
    %55 = vector.shape_cast %54 : vector<1x256xi1> to vector<1x256xi1>
    %56 = vector.broadcast %55 : vector<1x256xi1> to vector<4x256xi1>
    %57 = vector.broadcast %cst_39 : f32 to vector<4x256xf32>
    %58 = arith.select %56, %9, %57 : vector<4x256xi1>, vector<4x256xf32>
    %c0_40 = arith.constant 0 : index
    %c128_41 = arith.constant 128 : index
    %59 = vector.load %arg10[%c0_40, %c128_41] : memref<8x512xf32, #tpu.memory_space<vmem>>, vector<4x256xf32>
    tpu.vector_store %arg10[%c0_40, %c128_41], %58 {strides = array<i32>} : memref<8x512xf32, #tpu.memory_space<vmem>>, vector<4x256xf32>,
    %c0_42 = arith.constant 0 : index
    %c111 = arith.constant 111 : index
    %60 = vector.load %arg9[%c0_42, %c111] : memref<8x512xf32, #tpu.memory_space<vmem>>, vector<8x256xf32>
    %c0_43 = arith.constant 0 : index
    %c112 = arith.constant 112 : index
    %61 = vector.load %arg8[%c0_43, %c112] : memref<8x512xf32, #tpu.memory_space<vmem>>, vector<8x256xf32>
    %c0_44 = arith.constant 0 : index
    %c113 = arith.constant 113 : index
    %62 = vector.load %arg10[%c0_44, %c113] : memref<8x512xf32, #tpu.memory_space<vmem>>, vector<8x256xf32>
    %63 = tpu.concatenate %60, %61, %62 in 0 : vector<8x256xf32>, vector<8x256xf32>, vector<8x256xf32> -> vector<24x256xf32>
    %c0_45 = arith.constant 0 : index
    %c0_46 = arith.constant 0 : index
    %64 = vector.load %arg4[%c0_45, %c0_46] : memref<4x72xf32, #tpu.memory_space<vmem>>, vector<4x24xf32>
    %cst_47 = arith.constant dense<0.000000e+00> : vector<4x256xf32>
    %65 = tpu.matmul %64, %63, %cst_47 {dimension_numbers = #tpu.dot_dimension_numbers<[1], [0], [0], [1], [0, 0, 1, 1], [], []>} : vector<4x24xf32>, vector<24x256xf32>, vector<4x256xf32> -> vector<4x256xf32>
    %c0_48 = arith.constant 0 : index
    %c127 = arith.constant 127 : index
    %66 = vector.load %arg9[%c0_48, %c127] : memref<8x512xf32, #tpu.memory_space<vmem>>, vector<8x256xf32>
    %c0_49 = arith.constant 0 : index
    %c128_50 = arith.constant 128 : index
    %67 = vector.load %arg8[%c0_49, %c128_50] : memref<8x512xf32, #tpu.memory_space<vmem>>, vector<8x256xf32>
    %c0_51 = arith.constant 0 : index
    %c129 = arith.constant 129 : index
    %68 = vector.load %arg10[%c0_51, %c129] : memref<8x512xf32, #tpu.memory_space<vmem>>, vector<8x256xf32>
    %69 = tpu.concatenate %66, %67, %68 in 0 : vector<8x256xf32>, vector<8x256xf32>, vector<8x256xf32> -> vector<24x256xf32>
    %c0_52 = arith.constant 0 : index
    %c24 = arith.constant 24 : index
    %70 = vector.load %arg4[%c0_52, %c24] : memref<4x72xf32, #tpu.memory_space<vmem>>, vector<4x24xf32>
    %cst_53 = arith.constant dense<0.000000e+00> : vector<4x256xf32>
    %71 = tpu.matmul %70, %69, %cst_53 {dimension_numbers = #tpu.dot_dimension_numbers<[1], [0], [0], [1], [0, 0, 1, 1], [], []>} : vector<4x24xf32>, vector<24x256xf32>, vector<4x256xf32> -> vector<4x256xf32>
    %72 = arith.addf %65, %71 : vector<4x256xf32>
    %c0_54 = arith.constant 0 : index
    %c143 = arith.constant 143 : index
    %73 = vector.load %arg9[%c0_54, %c143] : memref<8x512xf32, #tpu.memory_space<vmem>>, vector<8x256xf32>
    %c0_55 = arith.constant 0 : index
    %c144 = arith.constant 144 : index
    %74 = vector.load %arg8[%c0_55, %c144] : memref<8x512xf32, #tpu.memory_space<vmem>>, vector<8x256xf32>
    %c0_56 = arith.constant 0 : index
    %c145 = arith.constant 145 : index
    %75 = vector.load %arg10[%c0_56, %c145] : memref<8x512xf32, #tpu.memory_space<vmem>>, vector<8x256xf32>
    %76 = tpu.concatenate %73, %74, %75 in 0 : vector<8x256xf32>, vector<8x256xf32>, vector<8x256xf32> -> vector<24x256xf32>
    %c0_57 = arith.constant 0 : index
    %c48 = arith.constant 48 : index
    %77 = vector.load %arg4[%c0_57, %c48] : memref<4x72xf32, #tpu.memory_space<vmem>>, vector<4x24xf32>
    %cst_58 = arith.constant dense<0.000000e+00> : vector<4x256xf32>
    %78 = tpu.matmul %77, %76, %cst_58 {dimension_numbers = #tpu.dot_dimension_numbers<[1], [0], [0], [1], [0, 0, 1, 1], [], []>} : vector<4x24xf32>, vector<24x256xf32>, vector<4x256xf32> -> vector<4x256xf32>
    %79 = arith.addf %72, %78 : vector<4x256xf32>
    %c0_59 = arith.constant 0 : index
    %c0_60 = arith.constant 0 : index
    %80 = vector.load %arg5[%c0_59, %c0_60] : memref<4x1xf32, #tpu.memory_space<vmem>>, vector<4x1xf32>
    %81 = vector.broadcast %80 : vector<4x1xf32> to vector<4x256xf32>
    %82 = arith.addf %79, %81 : vector<4x256xf32>
    %c0_61 = arith.constant 0 : index
    %c0_62 = arith.constant 0 : index
    %c0_63 = arith.constant 0 : index
    %83 = vector.load %arg6[%c0_61, %c0_62, %c0_63] : memref<1x4x256xf32, #tpu.memory_space<vmem>>, vector<1x4x256xf32>
    %84 = vector.shape_cast %83 : vector<1x4x256xf32> to vector<4x256xf32>
    %85 = vector.shape_cast %82 : vector<4x256xf32> to vector<1x4x256xf32>
    tpu.vector_store %arg6[%c0_61, %c0_62, %c0_63], %85 {strides = array<i32>} : memref<1x4x256xf32, #tpu.memory_space<vmem>>, vector<1x4x256xf32>,
    %cst_64 = arith.constant dense<0.000000e+00> : vector<4xf32>
    %86 = vector.multi_reduction <add>, %79, %cst_64 [1] : vector<4x256xf32> to vector<4xf32>
    %87 = vector.shape_cast %86 : vector<4xf32> to vector<4x1xf32>
    %88 = arith.mulf %79, %79 : vector<4x256xf32>
    %cst_65 = arith.constant dense<0.000000e+00> : vector<4xf32>
    %89 = vector.multi_reduction <add>, %88, %cst_65 [1] : vector<4x256xf32> to vector<4xf32>
    %90 = vector.shape_cast %89 : vector<4xf32> to vector<4x1xf32>
    %91 = tpu.concatenate %87, %90 in 1 : vector<4x1xf32>, vector<4x1xf32> -> vector<4x2xf32>
    %c0_66 = arith.constant 0 : index
    %c0_67 = arith.constant 0 : index
    %c0_68 = arith.constant 0 : index
    %92 = vector.load %arg7[%c0_66, %c0_67, %c0_68] : memref<1x4x2xf32, #tpu.memory_space<vmem>>, vector<1x4x2xf32>
    %93 = vector.shape_cast %92 : vector<1x4x2xf32> to vector<4x2xf32>
    %94 = vector.shape_cast %91 : vector<4x2xf32> to vector<1x4x2xf32>
    tpu.vector_store %arg7[%c0_66, %c0_67, %c0_68], %94 {strides = array<i32>} : memref<1x4x2xf32, #tpu.memory_space<vmem>>, vector<1x4x2xf32>,
    return
  }
  func.func @transform_0(%arg0: i32) -> (i32, i32, i32) {
    %c0_i32 = arith.constant 0 : i32
    %c0_i32_0 = arith.constant 0 : i32
    %c0_i32_1 = arith.constant 0 : i32
    return %arg0, %c0_i32, %c0_i32_0 : i32, i32, i32
  }
  func.func @transform_1(%arg0: i32) -> (i32, i32) {
    %c0_i32 = arith.constant 0 : i32
    %c0_i32_0 = arith.constant 0 : i32
    %c0_i32_1 = arith.constant 0 : i32
    return %c0_i32, %c0_i32_0 : i32, i32
  }
  func.func @transform_2(%arg0: i32) -> (i32, i32) {
    %c0_i32 = arith.constant 0 : i32
    %c0_i32_0 = arith.constant 0 : i32
    %c0_i32_1 = arith.constant 0 : i32
    return %c0_i32, %c0_i32_0 : i32, i32
  }
  func.func @transform_3(%arg0: i32) -> (i32, i32) {
    %c0_i32 = arith.constant 0 : i32
    %c0_i32_0 = arith.constant 0 : i32
    %c0_i32_1 = arith.constant 0 : i32
    return %c0_i32, %c0_i32_0 : i32, i32
  }
  func.func @transform_4(%arg0: i32) -> (i32, i32) {
    %c0_i32 = arith.constant 0 : i32
    %c0_i32_0 = arith.constant 0 : i32
    %c0_i32_1 = arith.constant 0 : i32
    return %c0_i32, %c0_i32_0 : i32, i32
  }
  func.func @transform_5(%arg0: i32) -> (i32, i32, i32) {
    %c0_i32 = arith.constant 0 : i32
    %c0_i32_0 = arith.constant 0 : i32
    %c0_i32_1 = arith.constant 0 : i32
    return %arg0, %c0_i32, %c0_i32_0 : i32, i32, i32
  }
  func.func @transform_6(%arg0: i32) -> (i32, i32, i32) {
    %c0_i32 = arith.constant 0 : i32
    %c0_i32_0 = arith.constant 0 : i32
    %c0_i32_1 = arith.constant 0 : i32
    return %arg0, %c0_i32, %c0_i32_0 : i32, i32, i32
  }
}

</mosaic_0001>

<llo_original>
// kernel: up_forward.5
$region0: #{up_forward.5}
  #allocation0 [shape = 'u32[]', space=smem, size = 0x4, offset = 0x4, fixed_abs, tag = 'smem constant byte address 0x4 - core index']
  #allocation1 [shape = 'u32[72,128]{1,0:T(1,128)}', space=vmem, size = 0x9000, scoped, tag = 'internal scratch']
  %s0 = inlined_call_operand.vmem [shape: f32[2,4,256], index: 0, kind: input, shape index: {}, may-alias: {0,3}]
  %s1 = inlined_call_operand.vmem [shape: f32[4,1], index: 1, kind: input, shape index: {}]
  %s2 = inlined_call_operand.vmem [shape: f32[4,1], index: 2, kind: input, shape index: {}]
  %s3 = inlined_call_operand.vmem [shape: f32[2,4,256], index: 3, kind: output, shape index: {}, may-alias: {0,3}]
  %s4 = sld [smem:[#allocation0]]
  $region45: #{up_forward.5} parent=0
    _
  %s6 = ssub.s32 1, %s4
  %s7 = scalar_select 0, %s6, %s4
  loop: start=0, step=1, limit=4
  $region2: #{up_forward.5} parent=0 // loop_pre_header
    _
  $region3: #{up_forward.5} parent=0 // loop_header
    %s9 = sphi 0, %s13
    %p10 = scmp.ge.s32.totalorder %s9, 4
    %s19 = sphi 0, %s21
    %s22 = sphi 0, %s19
    %s23 = sphi 0, %s22
    %s39 = sphi 0, %s23
    %s43 = sphi 0, %s43
    %s45 = sphi 0, %s43
    %s46 = sphi 0, %s45
    %s60 = sphi 0, %s46
    %s64 = sphi 0, %s64
    %s66 = sphi 0, %s64
    %s67 = sphi 0, %s66
    %s81 = sphi 0, %s67
    %s87 = sphi 0, %s89
    %s90 = sphi 0, %s87
    %s91 = sphi 0, %s90
    %s107 = sphi 0, %s91
  $region4: #{up_forward.5} parent=0 // loop_header_branch
    %12 = sbr.rel (%p10) target = $region8
  $region5: #{up_forward.5} parent=0 // loop_body
    %s14 = ssub.s32 %s9, 1
    %s15 = ssub.s32 %s9, 2
    %s16 = sadd.s32 %s9, 1
    %s17 = ssub.s32 %s9, %s16
    %p18 = scmp.eq.s32.totalorder %s17, 0
    %s20 = sadd.s32 %s19, 1
    %s21 = scalar_select %p18, %s19, %s20
    %p24 = pneg %p18
    %p25 = scmp.eq.s32.totalorder %s9, 1
    %p26 = por %p24, %p25
    %p27 = scmp.ne.s32.totalorder %s19, %s22
    %p28 = scmp.eq.s32.totalorder %s9, 0
    %p29 = por %p27, %p28
    %p30 = scmp.ne.s32.totalorder %s19, %s22
    %p31 = scmp.eq.s32.totalorder %s14, 1
    %p32 = por %p30, %p31
    %p33 = scmp.ne.s32.totalorder %s22, %s23
    %p34 = scmp.eq.s32.totalorder %s14, 0
    %p35 = por %p33, %p34
    %p36 = scmp.ne.s32.totalorder %s22, %s23
    %p37 = scmp.eq.s32.totalorder %s15, 1
    %p38 = por %p36, %p37
    %p40 = scmp.ne.s32.totalorder %s23, %s39
    %p41 = scmp.eq.s32.totalorder %s15, 0
    %p42 = por %p40, %p41
    %s44 = sadd.s32 %s43, 1
    %p47 = scmp.eq.s32.totalorder %s9, 1
    %p48 = scmp.ne.s32.totalorder %s43, %s45
    %p49 = scmp.eq.s32.totalorder %s9, 0
    %p50 = por %p48, %p49
    %p51 = scmp.ne.s32.totalorder %s43, %s45
    %p52 = scmp.eq.s32.totalorder %s14, 1
    %p53 = por %p51, %p52
    %p54 = scmp.ne.s32.totalorder %s45, %s46
    %p55 = scmp.eq.s32.totalorder %s14, 0
    %p56 = por %p54, %p55
    %p57 = scmp.ne.s32.totalorder %s45, %s46
    %p58 = scmp.eq.s32.totalorder %s15, 1
    %p59 = por %p57, %p58
    %p61 = scmp.ne.s32.totalorder %s46, %s60
    %p62 = scmp.eq.s32.totalorder %s15, 0
    %p63 = por %p61, %p62
    %s65 = sadd.s32 %s64, 1
    %p68 = scmp.eq.s32.totalorder %s9, 1
    %p69 = scmp.ne.s32.totalorder %s64, %s66
    %p70 = scmp.eq.s32.totalorder %s9, 0
    %p71 = por %p69, %p70
    %p72 = scmp.ne.s32.totalorder %s64, %s66
    %p73 = scmp.eq.s32.totalorder %s14, 1
    %p74 = por %p72, %p73
    %p75 = scmp.ne.s32.totalorder %s66, %s67
    %p76 = scmp.eq.s32.totalorder %s14, 0
    %p77 = por %p75, %p76
    %p78 = scmp.ne.s32.totalorder %s66, %s67
    %p79 = scmp.eq.s32.totalorder %s15, 1
    %p80 = por %p78, %p79
    %p82 = scmp.ne.s32.totalorder %s67, %s81
    %p83 = scmp.eq.s32.totalorder %s15, 0
    %p84 = por %p82, %p83
    %s85 = ssub.s32 %s9, %s16
    %p86 = scmp.eq.s32.totalorder %s85, 0
    %s88 = sadd.s32 %s87, 1
    %s89 = scalar_select %p86, %s87, %s88
    %p92 = pneg %p86
    %p93 = scmp.eq.s32.totalorder %s9, 1
    %p94 = por %p92, %p93
    %p95 = scmp.ne.s32.totalorder %s87, %s90
    %p96 = scmp.eq.s32.totalorder %s9, 0
    %p97 = por %p95, %p96
    %p98 = scmp.ne.s32.totalorder %s87, %s90
    %p99 = scmp.eq.s32.totalorder %s14, 1
    %p100 = por %p98, %p99
    %p101 = scmp.ne.s32.totalorder %s90, %s91
    %p102 = scmp.eq.s32.totalorder %s14, 0
    %p103 = por %p101, %p102
    %p104 = scmp.ne.s32.totalorder %s90, %s91
    %p105 = scmp.eq.s32.totalorder %s15, 1
    %p106 = por %p104, %p105
    %p108 = scmp.ne.s32.totalorder %s91, %s107
    %p109 = scmp.eq.s32.totalorder %s15, 0
    %p110 = por %p108, %p109
    %p111 = scmp.le.s32.totalorder 1, %s9
    %p112 = scmp.lt.s32.totalorder %s9, 3
    %p113 = pnand %p111, %p112
    %p114 = pneg %p113
    // Predicated region
    $region9: #{up_forward.5} parent=5 // pred_check
      _
    $region10: #{up_forward.5} parent=5 // pred_check_branch
      %116 = sbr.rel (%p113) target = $region12
    $region11: #{up_forward.5} parent=5 // pred_region
      %s117 = ssub.s32 %s9, 1
      // Predicated region
      $region13: #{up_forward.5} parent=11 // pred_check
        %p118 = pneg %p56
      $region14: #{up_forward.5} parent=11 // pred_check_branch
        %120 = sbr.rel (%p118) target = $region16
      $region15: #{up_forward.5} parent=11 // pred_region
        _
      $region16: #{up_forward.5} parent=11 // pred_fallthru
        _
      // Predicated region
      $region17: #{up_forward.5} parent=11 // pred_check
        %p121 = pneg %p77
      $region18: #{up_forward.5} parent=11 // pred_check_branch
        %123 = sbr.rel (%p121) target = $region20
      $region19: #{up_forward.5} parent=11 // pred_region
        _
      $region20: #{up_forward.5} parent=11 // pred_fallthru
        _
    $region12: #{up_forward.5} parent=5 // pred_fallthru
      _
    %p124 = scmp.lt.s32.totalorder %s9, 2
    // Predicated region
    $region21: #{up_forward.5} parent=5 // pred_check
      %p125 = pneg %p124
    $region22: #{up_forward.5} parent=5 // pred_check_branch
      %127 = sbr.rel (%p125) target = $region24
    $region23: #{up_forward.5} parent=5 // pred_region
      // Predicated region
      $region25: #{up_forward.5} parent=23 // pred_check
        %p128 = pneg %p29
      $region26: #{up_forward.5} parent=23 // pred_check_branch
        %130 = sbr.rel (%p128) target = $region28
      $region27: #{up_forward.5} parent=23 // pred_region
        %p131 = scmp.lt.s32.totalorder %s9, 1
        %s132 = scalar_select %p131, %s9, 1
        %s133 = smul.addr %s132, 2
        %s134 = smul.addr %s133, 4
        %s135 = scalar_lea.vmem %s0, %s134
      $region28: #{up_forward.5} parent=23 // pred_fallthru
        _
    $region24: #{up_forward.5} parent=5 // pred_fallthru
      _
    %p136 = scmp.le.s32.totalorder 1, %s9
    %p137 = scmp.lt.s32.totalorder %s9, 3
    %p138 = pnand %p136, %p137
    %p139 = pneg %p138
    // Predicated region
    $region29: #{up_forward.5} parent=5 // pred_check
      _
    $region30: #{up_forward.5} parent=5 // pred_check_branch
      %141 = sbr.rel (%p138) target = $region32
    $region31: #{up_forward.5} parent=5 // pred_region
      %s142 = ssub.s32 %s9, 1
      %p143 = scmp.lt.s32.totalorder %s14, 1
      %s144 = scalar_select %p143, %s14, 1
      %s145 = smul.addr %s144, 2
      %s146 = smul.addr %s145, 4
      %s147 = scalar_lea.vmem %s0, %s146
      %p148 = pneg %p35
      %p149 = pneg %p32
      %p150 = pneg %p56
      %p151 = pneg %p53
      %p152 = pneg %p77
      %p153 = pneg %p74
      %p154 = pneg %p103
      %p155 = pneg %p100
      %p156 = scmp.lt.s32.totalorder %s14, 1
      %s157 = scalar_select %p156, %s14, 1
      %s158 = smul.addr %s157, 2
      %s159 = smul.addr %s158, 4
      %s160 = scalar_lea.vmem %s3, %s159
      %p161 = scmp.lt.s32.totalorder %s14, 1
      %s162 = scalar_select %p161, %s14, 1
      %s163 = smul.addr %s162, 2
      %s164 = smul.addr %s163, 4
      %s165 = scalar_lea.vmem %s0, %s164
      %p166 = scmp.lt.s32.totalorder %s14, 1
      %s167 = scalar_select %p166, %s14, 1
      %s168 = smul.addr %s167, 2
      %s169 = smul.addr %s168, 4
      %s170 = scalar_lea.vmem %s3, %s169
      %v171 = vld [vmem:[%s165] sm:$0xff]
      %v172 = vld [vmem:[%s1] sm:$0xf]
      %174 = vset.pattern.permute.xlu0 0
      %175 = vperm.xlu0 %174, %v172
      %v176 = vpop.permute.xlu0 %175
      %v178 = vunpack.c.l.s4 839922192
      %v179 = vunpack.c.0.s8 %v178
      %v180 = vperm.slane %v176, %v179
      %v182 = vmul.f32 %v171, %v180
      %v183 = vld [vmem:[%s2] sm:$0xf]
      %185 = vset.pattern.permute.xlu0 0
      %186 = vperm.xlu0 %185, %v183
      %v187 = vpop.permute.xlu0 %186
      %v189 = vunpack.c.l.s4 839922192
      %v190 = vunpack.c.0.s8 %v189
      %v191 = vperm.slane %v187, %v190
      %v193 = vadd.f32 %v182, %v191
      %v194 = vmax.f32 %v193, 0.0
      %195 = vst [vmem:[%s170] sm:$0xff] %v194
      %p196 = scmp.lt.s32.totalorder %s14, 1
      %s197 = scalar_select %p196, %s14, 1
      %s198 = smul.addr %s197, 2
      %s199 = smul.addr %s198, 4
      %s200 = scalar_lea.vmem %s3, %s199
      // Predicated region
      $region33: #{up_forward.5} parent=31 // pred_check
        %p201 = pneg %p100
      $region34: #{up_forward.5} parent=31 // pred_check_branch
        %203 = sbr.rel (%p201) target = $region36
      $region35: #{up_forward.5} parent=31 // pred_region
        _
      $region36: #{up_forward.5} parent=31 // pred_fallthru
        _
    $region32: #{up_forward.5} parent=5 // pred_fallthru
      _
    %p204 = scmp.le.s32.totalorder 2, %s9
    // Predicated region
    $region37: #{up_forward.5} parent=5 // pred_check
      %p205 = pneg %p204
    $region38: #{up_forward.5} parent=5 // pred_check_branch
      %207 = sbr.rel (%p205) target = $region40
    $region39: #{up_forward.5} parent=5 // pred_region
      %s208 = ssub.s32 %s9, 2
      // Predicated region
      $region41: #{up_forward.5} parent=39 // pred_check
        %p209 = pneg %p106
      $region42: #{up_forward.5} parent=39 // pred_check_branch
        %211 = sbr.rel (%p209) target = $region44
      $region43: #{up_forward.5} parent=39 // pred_region
        %p212 = scmp.lt.s32.totalorder %s15, 1
        %s213 = scalar_select %p212, %s15, 1
        %s214 = smul.addr %s213, 2
        %s215 = smul.addr %s214, 4
        %s216 = scalar_lea.vmem %s3, %s215
      $region44: #{up_forward.5} parent=39 // pred_fallthru
        _
    $region40: #{up_forward.5} parent=5 // pred_fallthru
      _
  $region6: #{up_forward.5} parent=0 // loop_footer
    %s13 = sadd.s32 1, %s9
  $region7: #{up_forward.5} parent=0 // loop_footer_branch
    %8 = sbr.rel target = $region3
  $region8: #{up_forward.5} parent=0 // loop_exit
    _

// kernel: up_forward.3
$region0: #{up_forward.3}
  #allocation0 [shape = 'u32[]', space=smem, size = 0x4, offset = 0x4, fixed_abs, tag = 'smem constant byte address 0x4 - core index']
  #allocation1 [shape = 'u32[72,128]{1,0:T(1,128)}', space=vmem, size = 0x9000, scoped, tag = 'internal scratch']
  #allocation2 [shape = 'f32[8,512]{1,0:T(8,128)}', space=vmem, size = 0x4000, scoped, tag = 'scratch operand']
  #allocation3 [shape = 'f32[8,512]{1,0:T(8,128)}', space=vmem, size = 0x4000, scoped, tag = 'scratch operand']
  #allocation4 [shape = 'f32[8,512]{1,0:T(8,128)}', space=vmem, size = 0x4000, scoped, tag = 'scratch operand']
  %s0 = inlined_call_operand.vmem [shape: f32[2,4,256], index: 0, kind: input, shape index: {}]
  %s1 = inlined_call_operand.vmem [shape: f32[2,4,256], index: 1, kind: input, shape index: {}]
  %s2 = inlined_call_operand.vmem [shape: f32[4,72], index: 2, kind: input, shape index: {}]
  %s3 = inlined_call_operand.vmem [shape: f32[4,1], index: 3, kind: input, shape index: {}]
  %s4 = inlined_call_operand.vmem [shape: f32[2,4,256], index: 4, kind: output, shape index: {0}]
  %s5 = inlined_call_operand.vmem [shape: f32[2,4,2], index: 5, kind: output, shape index: {1}]
  %6 = xla_tuple %s4, %s5
  %s7 = sld [smem:[#allocation0]]
  $region57: #{up_forward.3} parent=0
    _
  %s9 = ssub.s32 1, %s7
  %s10 = scalar_select 0, %s9, %s7
  loop: start=0, step=1, limit=4
  $region2: #{up_forward.3} parent=0 // loop_pre_header
    _
  $region3: #{up_forward.3} parent=0 // loop_header
    %s12 = sphi 0, %s16
    %p13 = scmp.ge.s32.totalorder %s12, 4
    %s22 = sphi 0, %s24
    %s25 = sphi 0, %s22
    %s26 = sphi 0, %s25
    %s42 = sphi 0, %s26
    %s48 = sphi 0, %s50
    %s51 = sphi 0, %s48
    %s52 = sphi 0, %s51
    %s68 = sphi 0, %s52
    %s72 = sphi 0, %s72
    %s74 = sphi 0, %s72
    %s75 = sphi 0, %s74
    %s89 = sphi 0, %s75
    %s93 = sphi 0, %s93
    %s95 = sphi 0, %s93
    %s96 = sphi 0, %s95
    %s110 = sphi 0, %s96
    %s116 = sphi 0, %s118
    %s119 = sphi 0, %s116
    %s120 = sphi 0, %s119
    %s136 = sphi 0, %s120
    %s142 = sphi 0, %s144
    %s145 = sphi 0, %s142
    %s146 = sphi 0, %s145
    %s162 = sphi 0, %s146
  $region4: #{up_forward.3} parent=0 // loop_header_branch
    %15 = sbr.rel (%p13) target = $region8
  $region5: #{up_forward.3} parent=0 // loop_body
    %s17 = ssub.s32 %s12, 1
    %s18 = ssub.s32 %s12, 2
    %s19 = sadd.s32 %s12, 1
    %s20 = ssub.s32 %s12, %s19
    %p21 = scmp.eq.s32.totalorder %s20, 0
    %s23 = sadd.s32 %s22, 1
    %s24 = scalar_select %p21, %s22, %s23
    %p27 = pneg %p21
    %p28 = scmp.eq.s32.totalorder %s12, 1
    %p29 = por %p27, %p28
    %p30 = scmp.ne.s32.totalorder %s22, %s25
    %p31 = scmp.eq.s32.totalorder %s12, 0
    %p32 = por %p30, %p31
    %p33 = scmp.ne.s32.totalorder %s22, %s25
    %p34 = scmp.eq.s32.totalorder %s17, 1
    %p35 = por %p33, %p34
    %p36 = scmp.ne.s32.totalorder %s25, %s26
    %p37 = scmp.eq.s32.totalorder %s17, 0
    %p38 = por %p36, %p37
    %p39 = scmp.ne.s32.totalorder %s25, %s26
    %p40 = scmp.eq.s32.totalorder %s18, 1
    %p41 = por %p39, %p40
    %p43 = scmp.ne.s32.totalorder %s26, %s42
    %p44 = scmp.eq.s32.totalorder %s18, 0
    %p45 = por %p43, %p44
    %s46 = ssub.s32 %s12, %s19
    %p47 = scmp.eq.s32.totalorder %s46, 0
    %s49 = sadd.s32 %s48, 1
    %s50 = scalar_select %p47, %s48, %s49
    %p53 = pneg %p47
    %p54 = scmp.eq.s32.totalorder %s12, 1
    %p55 = por %p53, %p54
    %p56 = scmp.ne.s32.totalorder %s48, %s51
    %p57 = scmp.eq.s32.totalorder %s12, 0
    %p58 = por %p56, %p57
    %p59 = scmp.ne.s32.totalorder %s48, %s51
    %p60 = scmp.eq.s32.totalorder %s17, 1
    %p61 = por %p59, %p60
    %p62 = scmp.ne.s32.totalorder %s51, %s52
    %p63 = scmp.eq.s32.totalorder %s17, 0
    %p64 = por %p62, %p63
    %p65 = scmp.ne.s32.totalorder %s51, %s52
    %p66 = scmp.eq.s32.totalorder %s18, 1
    %p67 = por %p65, %p66
    %p69 = scmp.ne.s32.totalorder %s52, %s68
    %p70 = scmp.eq.s32.totalorder %s18, 0
    %p71 = por %p69, %p70
    %s73 = sadd.s32 %s72, 1
    %p76 = scmp.eq.s32.totalorder %s12, 1
    %p77 = scmp.ne.s32.totalorder %s72, %s74
    %p78 = scmp.eq.s32.totalorder %s12, 0
    %p79 = por %p77, %p78
    %p80 = scmp.ne.s32.totalorder %s72, %s74
    %p81 = scmp.eq.s32.totalorder %s17, 1
    %p82 = por %p80, %p81
    %p83 = scmp.ne.s32.totalorder %s74, %s75
    %p84 = scmp.eq.s32.totalorder %s17, 0
    %p85 = por %p83, %p84
    %p86 = scmp.ne.s32.totalorder %s74, %s75
    %p87 = scmp.eq.s32.totalorder %s18, 1
    %p88 = por %p86, %p87
    %p90 = scmp.ne.s32.totalorder %s75, %s89
    %p91 = scmp.eq.s32.totalorder %s18, 0
    %p92 = por %p90, %p91
    %s94 = sadd.s32 %s93, 1
    %p97 = scmp.eq.s32.totalorder %s12, 1
    %p98 = scmp.ne.s32.totalorder %s93, %s95
    %p99 = scmp.eq.s32.totalorder %s12, 0
    %p100 = por %p98, %p99
    %p101 = scmp.ne.s32.totalorder %s93, %s95
    %p102 = scmp.eq.s32.totalorder %s17, 1
    %p103 = por %p101, %p102
    %p104 = scmp.ne.s32.totalorder %s95, %s96
    %p105 = scmp.eq.s32.totalorder %s17, 0
    %p106 = por %p104, %p105
    %p107 = scmp.ne.s32.totalorder %s95, %s96
    %p108 = scmp.eq.s32.totalorder %s18, 1
    %p109 = por %p107, %p108
    %p111 = scmp.ne.s32.totalorder %s96, %s110
    %p112 = scmp.eq.s32.totalorder %s18, 0
    %p113 = por %p111, %p112
    %s114 = ssub.s32 %s12, %s19
    %p115 = scmp.eq.s32.totalorder %s114, 0
    %s117 = sadd.s32 %s116, 1
    %s118 = scalar_select %p115, %s116, %s117
    %p121 = pneg %p115
    %p122 = scmp.eq.s32.totalorder %s12, 1
    %p123 = por %p121, %p122
    %p124 = scmp.ne.s32.totalorder %s116, %s119
    %p125 = scmp.eq.s32.totalorder %s12, 0
    %p126 = por %p124, %p125
    %p127 = scmp.ne.s32.totalorder %s116, %s119
    %p128 = scmp.eq.s32.totalorder %s17, 1
    %p129 = por %p127, %p128
    %p130 = scmp.ne.s32.totalorder %s119, %s120
    %p131 = scmp.eq.s32.totalorder %s17, 0
    %p132 = por %p130, %p131
    %p133 = scmp.ne.s32.totalorder %s119, %s120
    %p134 = scmp.eq.s32.totalorder %s18, 1
    %p135 = por %p133, %p134
    %p137 = scmp.ne.s32.totalorder %s120, %s136
    %p138 = scmp.eq.s32.totalorder %s18, 0
    %p139 = por %p137, %p138
    %s140 = ssub.s32 %s12, %s19
    %p141 = scmp.eq.s32.totalorder %s140, 0
    %s143 = sadd.s32 %s142, 1
    %s144 = scalar_select %p141, %s142, %s143
    %p147 = pneg %p141
    %p148 = scmp.eq.s32.totalorder %s12, 1
    %p149 = por %p147, %p148
    %p150 = scmp.ne.s32.totalorder %s142, %s145
    %p151 = scmp.eq.s32.totalorder %s12, 0
    %p152 = por %p150, %p151
    %p153 = scmp.ne.s32.totalorder %s142, %s145
    %p154 = scmp.eq.s32.totalorder %s17, 1
    %p155 = por %p153, %p154
    %p156 = scmp.ne.s32.totalorder %s145, %s146
    %p157 = scmp.eq.s32.totalorder %s17, 0
    %p158 = por %p156, %p157
    %p159 = scmp.ne.s32.totalorder %s145, %s146
    %p160 = scmp.eq.s32.totalorder %s18, 1
    %p161 = por %p159, %p160
    %p163 = scmp.ne.s32.totalorder %s146, %s162
    %p164 = scmp.eq.s32.totalorder %s18, 0
    %p165 = por %p163, %p164
    %p166 = scmp.le.s32.totalorder 1, %s12
    %p167 = scmp.lt.s32.totalorder %s12, 3
    %p168 = pnand %p166, %p167
    %p169 = pneg %p168
    // Predicated region
    $region9: #{up_forward.3} parent=5 // pred_check
      _
    $region10: #{up_forward.3} parent=5 // pred_check_branch
      %171 = sbr.rel (%p168) target = $region12
    $region11: #{up_forward.3} parent=5 // pred_region
      %s172 = ssub.s32 %s12, 1
      // Predicated region
      $region13: #{up_forward.3} parent=11 // pred_check
        %p173 = pneg %p85
      $region14: #{up_forward.3} parent=11 // pred_check_branch
        %175 = sbr.rel (%p173) target = $region16
      $region15: #{up_forward.3} parent=11 // pred_region
        _
      $region16: #{up_forward.3} parent=11 // pred_fallthru
        _
      // Predicated region
      $region17: #{up_forward.3} parent=11 // pred_check
        %p176 = pneg %p106
      $region18: #{up_forward.3} parent=11 // pred_check_branch
        %178 = sbr.rel (%p176) target = $region20
      $region19: #{up_forward.3} parent=11 // pred_region
        _
      $region20: #{up_forward.3} parent=11 // pred_fallthru
        _
    $region12: #{up_forward.3} parent=5 // pred_fallthru
      _
    %p179 = scmp.lt.s32.totalorder %s12, 2
    // Predicated region
    $region21: #{up_forward.3} parent=5 // pred_check
      %p180 = pneg %p179
    $region22: #{up_forward.3} parent=5 // pred_check_branch
      %182 = sbr.rel (%p180) target = $region24
    $region23: #{up_forward.3} parent=5 // pred_region
      // Predicated region
      $region25: #{up_forward.3} parent=23 // pred_check
        %p183 = pneg %p32
      $region26: #{up_forward.3} parent=23 // pred_check_branch
        %185 = sbr.rel (%p183) target = $region28
      $region27: #{up_forward.3} parent=23 // pred_region
        %p186 = scmp.lt.s32.totalorder %s12, 1
        %s187 = scalar_select %p186, %s12, 1
        %s188 = smul.addr %s187, 2
        %s189 = smul.addr %s188, 4
        %s190 = scalar_lea.vmem %s0, %s189
      $region28: #{up_forward.3} parent=23 // pred_fallthru
        _
      // Predicated region
      $region29: #{up_forward.3} parent=23 // pred_check
        %p191 = pneg %p58
      $region30: #{up_forward.3} parent=23 // pred_check_branch
        %193 = sbr.rel (%p191) target = $region32
      $region31: #{up_forward.3} parent=23 // pred_region
        %p194 = scmp.lt.s32.totalorder %s12, 1
        %s195 = scalar_select %p194, %s12, 1
        %s196 = smul.addr %s195, 2
        %s197 = smul.addr %s196, 4
        %s198 = scalar_lea.vmem %s1, %s197
      $region32: #{up_forward.3} parent=23 // pred_fallthru
        _
    $region24: #{up_forward.3} parent=5 // pred_fallthru
      _
    %p199 = scmp.le.s32.totalorder 1, %s12
    %p200 = scmp.lt.s32.totalorder %s12, 3
    %p201 = pnand %p199, %p200
    %p202 = pneg %p201
    // Predicated region
    $region33: #{up_forward.3} parent=5 // pred_check
      _
    $region34: #{up_forward.3} parent=5 // pred_check_branch
      %204 = sbr.rel (%p201) target = $region36
    $region35: #{up_forward.3} parent=5 // pred_region
      %s205 = ssub.s32 %s12, 1
      %p206 = scmp.lt.s32.totalorder %s17, 1
      %s207 = scalar_select %p206, %s17, 1
      %s208 = smul.addr %s207, 2
      %s209 = smul.addr %s208, 4
      %s210 = scalar_lea.vmem %s0, %s209
      %p211 = pneg %p38
      %p212 = pneg %p35
      %p213 = scmp.lt.s32.totalorder %s17, 1
      %s214 = scalar_select %p213, %s17, 1
      %s215 = smul.addr %s214, 2
      %s216 = smul.addr %s215, 4
      %s217 = scalar_lea.vmem %s1, %s216
      %p218 = pneg %p64
      %p219 = pneg %p61
      %p220 = pneg %p85
      %p221 = pneg %p82
      %p222 = pneg %p106
      %p223 = pneg %p103
      %p224 = pneg %p132
      %p225 = pneg %p129
      %p226 = scmp.lt.s32.totalorder %s17, 1
      %s227 = scalar_select %p226, %s17, 1
      %s228 = smul.addr %s227, 2
      %s229 = smul.addr %s228, 4
      %s230 = scalar_lea.vmem %s4, %s229
      %p231 = pneg %p158
      %p232 = pneg %p155
      %p233 = scmp.lt.s32.totalorder %s17, 1
      %s234 = scalar_select %p233, %s17, 1
      %s235 = smul.addr %s234, 4
      %s236 = scalar_lea.vmem %s5, %s235
      %p237 = scmp.lt.s32.totalorder %s17, 1
      %s238 = scalar_select %p237, %s17, 1
      %s239 = smul.addr %s238, 2
      %s240 = smul.addr %s239, 4
      %s241 = scalar_lea.vmem %s0, %s240
      %p242 = scmp.lt.s32.totalorder %s17, 1
      %s243 = scalar_select %p242, %s17, 1
      %s244 = smul.addr %s243, 2
      %s245 = smul.addr %s244, 4
      %s246 = scalar_lea.vmem %s1, %s245
      %p247 = scmp.lt.s32.totalorder %s17, 1
      %s248 = scalar_select %p247, %s17, 1
      %s249 = smul.addr %s248, 2
      %s250 = smul.addr %s249, 4
      %s251 = scalar_lea.vmem %s4, %s250
      %p252 = scmp.lt.s32.totalorder %s17, 1
      %s253 = scalar_select %p252, %s17, 1
      %s254 = smul.addr %s253, 4
      %s255 = scalar_lea.vmem %s5, %s254
      %256 = vst [vmem:[#allocation2] sm:$0xff] 0.0
      %257 = vst [vmem:[#allocation2 + $0x18] sm:$0xff] 0.0
      %258 = vst [vmem:[#allocation3] sm:$0xff] 0.0
      %259 = vst [vmem:[#allocation3 + $0x18] sm:$0xff] 0.0
      %260 = vst [vmem:[#allocation4] sm:$0xff] 0.0
      %261 = vst [vmem:[#allocation4 + $0x18] sm:$0xff] 0.0
      %v262 = vld [vmem:[%s241] sm:$0xff]
      %v263 = vlaneseq
      %v264 = vand.u32 %v263, 127
      %v265 = vadd.s32 %v264, 128
      %vm266 = vcmp.lt.s32.totalorder %v264, 0
      %v267 = vsub.s32 0, %v264
      %v268 = vsel %vm266, %v267, %v264
      %v269 = vshrl.u32 %v268, 4
      %v270 = vand.u32 %v268, 15
      %v271 = vsub.s32 0, %v270
      %v272 = vsel %vm266, %v271, %v270
      %vm273 = vcmp.lt.s32.totalorder %v265, 0
      %v274 = vsub.s32 0, %v265
      %v275 = vsel %vm273, %v274, %v265
      %v276 = vshrl.u32 %v275, 4
      %v277 = vand.u32 %v275, 15
      %v278 = vsub.s32 0, %v277
      %v279 = vsel %vm273, %v278, %v277
      %vm280 = vcmp.ne.s32.totalorder %v272, 0
      %vm281 = vcmp.ne.s32.totalorder %v279, 0
      %vm282 = vcmp.lt.s32.totalorder %v272, 0
      %vm283 = vcmp.lt.s32.totalorder %v279, 0
      %vm284 = vmand %vm282, %vm280
      %vm285 = vmand %vm283, %vm281
      %v286 = vadd.s32 %v272, 16
      %v287 = vadd.s32 %v279, 16
      %v288 = vsel %vm284, %v286, %v272
      %v289 = vsel %vm285, %v287, %v279
      %291 = vst [vmem:[#allocation1] ss:$2 sm:$0xff] %v262
      %v292 = vld.sshfl [vmem:[#allocation1] sm:$0xff pattern:$0x75316420]
      %v293 = vld.sshfl [vmem:[#allocation1 + $0x8] sm:$0xff pattern:$0x75316420]
      %296 = vst [vmem:[#allocation2 + $0x8] sm:$0xf] %v292
      %297 = vst [vmem:[#allocation2 + $0x10] sm:$0xf] %v293
      %vm298 = vcmp.ne.s32.totalorder %v288, 15
      %vm299 = vcmp.ne.s32.totalorder %v289, 15
      %v300 = vsel %vm298, 1, 0
      %v301 = vsel %vm299, 1, 0
      %vm302 = vcmp.eq.s32.totalorder %v300, 1
      %vm303 = vcmp.eq.s32.totalorder %v301, 1
      %304 = vst [vmem:[#allocation1] ss:$2 sm:$0xff] %v262
      %v305 = vld.sshfl [vmem:[#allocation1] sm:$0xff pattern:$0x75316420]
      %v306 = vld.sshfl [vmem:[#allocation1 + $0x8] sm:$0xff pattern:$0x75316420]
      %v309 = vsel %vm302, %v305, 0.0
      %v310 = vsel %vm303, %v306, 0.0
      %311 = vst [vmem:[#allocation3 + $0x8] sm:$0xf] %v309
      %312 = vst [vmem:[#allocation3 + $0x10] sm:$0xf] %v310
      %vm313 = vcmp.ne.s32.totalorder %v288, 0
      %vm314 = vcmp.ne.s32.totalorder %v289, 0
      %v315 = vsel %vm313, 1, 0
      %v316 = vsel %vm314, 1, 0
      %vm317 = vcmp.eq.s32.totalorder %v315, 1
      %vm318 = vcmp.eq.s32.totalorder %v316, 1
      %319 = vst [vmem:[#allocation1] ss:$2 sm:$0xff] %v262
      %v320 = vld.sshfl [vmem:[#allocation1] sm:$0xff pattern:$0x75316420]
      %v321 = vld.sshfl [vmem:[#allocation1 + $0x8] sm:$0xff pattern:$0x75316420]
      %v324 = vsel %vm317, %v320, 0.0
      %v325 = vsel %vm318, %v321, 0.0
      %326 = vst [vmem:[#allocation4 + $0x8] sm:$0xf] %v324
      %327 = vst [vmem:[#allocation4 + $0x10] sm:$0xf] %v325
      %v328 = vld [vmem:[%s246] sm:$0xff]
      %s330 = scalar_lea.vmem [#allocation1], 1
      %331 = vst [vmem:[%s330] ss:$2 sm:$0xff] %v328
      %v332 = vld.sshfl [vmem:[#allocation1] sm:$0xff pattern:$0x75316420]
      %v333 = vld.sshfl [vmem:[#allocation1 + $0x8] sm:$0xff pattern:$0x75316420]
      %336 = vst [vmem:[#allocation2 + $0x8] sm:$0xf0] %v332
      %337 = vst [vmem:[#allocation2 + $0x10] sm:$0xf0] %v333
      %338 = vst [vmem:[#allocation1] ss:$2 sm:$0xff] %v328
      %v339 = vld.sshfl [vmem:[#allocation1] sm:$0xff pattern:$0x75316420]
      %v340 = vld.sshfl [vmem:[#allocation1 + $0x8] sm:$0xff pattern:$0x75316420]
      %v343 = vsel %vm302, %v339, 0.0
      %v344 = vsel %vm303, %v340, 0.0
      %v347 = vrot.slane %v343, 4
      %v348 = vrot.slane %v344, 4
      %351 = vst [vmem:[#allocation3 + $0x8] sm:$0xf0] %v347
      %352 = vst [vmem:[#allocation3 + $0x10] sm:$0xf0] %v348
      %353 = vst [vmem:[#allocation1] ss:$2 sm:$0xff] %v328
      %v354 = vld.sshfl [vmem:[#allocation1] sm:$0xff pattern:$0x75316420]
      %v355 = vld.sshfl [vmem:[#allocation1 + $0x8] sm:$0xff pattern:$0x75316420]
      %v358 = vsel %vm317, %v354, 0.0
      %v359 = vsel %vm318, %v355, 0.0
      %v362 = vrot.slane %v358, 4
      %v363 = vrot.slane %v359, 4
      %366 = vst [vmem:[#allocation4 + $0x8] sm:$0xf0] %v362
      %367 = vst [vmem:[#allocation4 + $0x10] sm:$0xf0] %v363
      %v368 = vld [vmem:[#allocation3] sm:$0xff]
      %v369 = vld [vmem:[#allocation3 + $0x8] sm:$0xff]
      %v370 = vld [vmem:[#allocation3 + $0x10] sm:$0xff]
      %v371 = vld [vmem:[#allocation2] sm:$0xff]
      %v372 = vld [vmem:[#allocation2 + $0x8] sm:$0xff]
      %v373 = vld [vmem:[#allocation2 + $0x10] sm:$0xff]
      %v374 = vld [vmem:[#allocation4] sm:$0xff]
      %v375 = vld [vmem:[#allocation4 + $0x8] sm:$0xff]
      %v376 = vld [vmem:[#allocation4 + $0x10] sm:$0xff]
      %380 = vrot.lane.b32.xlu0 %v371, 127
      %v381 = vpop.permute.xlu0 %380
      %382 = vrot.lane.b32.xlu0 %v372, 127
      %v383 = vpop.permute.xlu0 %382
      %384 = vrot.lane.b32.xlu0 %v373, 127
      %v385 = vpop.permute.xlu0 %384
      %vm386 = vcmask 1039360
      %v387 = vsel %vm386, %v381, %v383
      %v388 = vsel %vm386, %v383, %v385
      %392 = vrot.lane.b32.xlu0 %v374, 126
      %v393 = vpop.permute.xlu0 %392
      %394 = vrot.lane.b32.xlu0 %v375, 126
      %v395 = vpop.permute.xlu0 %394
      %396 = vrot.lane.b32.xlu0 %v376, 126
      %v397 = vpop.permute.xlu0 %396
      %vm398 = vcmask 1031168
      %v399 = vsel %vm398, %v393, %v395
      %v400 = vsel %vm398, %v395, %v397
      %v401 = vld [vmem:[%s2] sm:$0xf]
      %v402 = vld [vmem:[#allocation4 + $0x8] sm:$0xff]
      %v403 = vld [vmem:[#allocation4 + $0x10] sm:$0xff]
      %v404 = vld [vmem:[#allocation4 + $0x18] sm:$0xff]
      %408 = vrot.lane.b32.xlu0 %v402, 126
      %v409 = vpop.permute.xlu0 %408
      %410 = vrot.lane.b32.xlu0 %v403, 126
      %v411 = vpop.permute.xlu0 %410
      %412 = vrot.lane.b32.xlu0 %v404, 126
      %v413 = vpop.permute.xlu0 %412
      %v414 = vsel %vm398, %v409, %v411
      %v415 = vsel %vm398, %v411, %v413
      %417 = vrot.lane.b32.xlu0 %v401, 104
      %v418 = vpop.permute.xlu0 %417
      %422 = vrot.lane.b32.xlu0 %v368, 1
      %v423 = vpop.permute.xlu0 %422
      %424 = vrot.lane.b32.xlu0 %v369, 1
      %v425 = vpop.permute.xlu0 %424
      %426 = vrot.lane.b32.xlu0 %v370, 1
      %v427 = vpop.permute.xlu0 %426
      %428 = vrot.lane.b32.xlu0 %v383, 1
      %v429 = vpop.permute.xlu0 %428
      %430 = vrot.lane.b32.xlu0 %v388, 1
      %v431 = vpop.permute.xlu0 %430
      %432 = vrot.lane.b32.xlu0 %v385, 1
      %v433 = vpop.permute.xlu0 %432
      %434 = vrot.lane.b32.xlu0 %v409, 1
      %v435 = vpop.permute.xlu0 %434
      %436 = vrot.lane.b32.xlu0 %v414, 1
      %v437 = vpop.permute.xlu0 %436
      %438 = vrot.lane.b32.xlu0 %v415, 1
      %v439 = vpop.permute.xlu0 %438
      %vm440 = vcmask 7168
      %v441 = vsel %vm440, %v423, %v425
      %v442 = vsel %vm440, %v425, %v427
      %v443 = vsel %vm440, %v429, %v431
      %v444 = vsel %vm440, %v431, %v433
      %v445 = vsel %vm440, %v435, %v437
      %v446 = vsel %vm440, %v437, %v439
      %vm453 = vcmask 195584
      %v454 = vsel %vm453, %v418, 0
      %456 = vmatpush.msra.mxu0 0.0
      %457 = vmatpush.msra.mxu0 0.0
      %458 = vmatpush.msra.mxu0 0.0
      %459 = vmatpush.msra.mxu0 0.0
      %460 = vmatpush.msra.mxu0 0.0
      %461 = vmatpush.msra.mxu0 0.0
      %462 = vmatpush.msra.mxu0 0.0
      %463 = vmatpush.msra.mxu0 0.0
      %464 = vmatpush.msra.mxu0 0.0
      %465 = vmatpush.msra.mxu0 0.0
      %466 = vmatpush.msra.mxu0 0.0
      %467 = vmatpush.msra.mxu0 0.0
      %468 = vmatpush.msra.mxu0 0.0
      %469 = vmatpush.msra.mxu0 %v445
      %470 = vmatpush.msra.mxu0 %v443
      %471 = vmatpush.msra.mxu0 %v441
      %472 = vmatmul.f32.gmra.mxu0 %v454
      %v473 = vpop.f32.mrf.mxu0
      %v474 = vadd.f32 0.0, %v473
      %475 = vdwg.mxu0
      %476 = vmatpush.msra.mxu0 0.0
      %477 = vmatpush.msra.mxu0 0.0
      %478 = vmatpush.msra.mxu0 0.0
      %479 = vmatpush.msra.mxu0 0.0
      %480 = vmatpush.msra.mxu0 0.0
      %481 = vmatpush.msra.mxu0 0.0
      %482 = vmatpush.msra.mxu0 0.0
      %483 = vmatpush.msra.mxu0 0.0
      %484 = vmatpush.msra.mxu0 0.0
      %485 = vmatpush.msra.mxu0 0.0
      %486 = vmatpush.msra.mxu0 0.0
      %487 = vmatpush.msra.mxu0 0.0
      %488 = vmatpush.msra.mxu0 0.0
      %489 = vmatpush.msra.mxu0 %v446
      %490 = vmatpush.msra.mxu0 %v444
      %491 = vmatpush.msra.mxu0 %v442
      %492 = vmatmul.f32.gmra.mxu0 %v454
      %v493 = vpop.f32.mrf.mxu0
      %v494 = vadd.f32 0.0, %v493
      %495 = vdwg.mxu0
      %496 = vrot.lane.b32.xlu0 %v368, 17
      %v497 = vpop.permute.xlu0 %496
      %498 = vrot.lane.b32.xlu0 %v369, 17
      %v499 = vpop.permute.xlu0 %498
      %500 = vrot.lane.b32.xlu0 %v370, 17
      %v501 = vpop.permute.xlu0 %500
      %502 = vrot.lane.b32.xlu0 %v387, 17
      %v503 = vpop.permute.xlu0 %502
      %504 = vrot.lane.b32.xlu0 %v388, 17
      %v505 = vpop.permute.xlu0 %504
      %506 = vrot.lane.b32.xlu0 %v385, 17
      %v507 = vpop.permute.xlu0 %506
      %508 = vrot.lane.b32.xlu0 %v399, 17
      %v509 = vpop.permute.xlu0 %508
      %510 = vrot.lane.b32.xlu0 %v400, 17
      %v511 = vpop.permute.xlu0 %510
      %512 = vrot.lane.b32.xlu0 %v397, 17
      %v513 = vpop.permute.xlu0 %512
      %vm514 = vcmask 138240
      %v515 = vsel %vm514, %v497, %v499
      %v516 = vsel %vm514, %v499, %v501
      %v517 = vsel %vm514, %v503, %v505
      %v518 = vsel %vm514, %v505, %v507
      %v519 = vsel %vm514, %v509, %v511
      %v520 = vsel %vm514, %v511, %v513
      %v527 = vsel %vm453, %v401, 0
      %529 = vmatpush.msra.mxu0 0.0
      %530 = vmatpush.msra.mxu0 0.0
      %531 = vmatpush.msra.mxu0 0.0
      %532 = vmatpush.msra.mxu0 0.0
      %533 = vmatpush.msra.mxu0 0.0
      %534 = vmatpush.msra.mxu0 0.0
      %535 = vmatpush.msra.mxu0 0.0
      %536 = vmatpush.msra.mxu0 0.0
      %537 = vmatpush.msra.mxu0 0.0
      %538 = vmatpush.msra.mxu0 0.0
      %539 = vmatpush.msra.mxu0 0.0
      %540 = vmatpush.msra.mxu0 0.0
      %541 = vmatpush.msra.mxu0 0.0
      %542 = vmatpush.msra.mxu0 %v519
      %543 = vmatpush.msra.mxu0 %v517
      %544 = vmatpush.msra.mxu0 %v515
      %545 = vmatmul.f32.gmra.mxu0 %v527
      %v546 = vpop.f32.mrf.mxu0
      %v547 = vadd.f32 %v474, %v546
      %548 = vdwg.mxu0
      %549 = vmatpush.msra.mxu0 0.0
      %550 = vmatpush.msra.mxu0 0.0
      %551 = vmatpush.msra.mxu0 0.0
      %552 = vmatpush.msra.mxu0 0.0
      %553 = vmatpush.msra.mxu0 0.0
      %554 = vmatpush.msra.mxu0 0.0
      %555 = vmatpush.msra.mxu0 0.0
      %556 = vmatpush.msra.mxu0 0.0
      %557 = vmatpush.msra.mxu0 0.0
      %558 = vmatpush.msra.mxu0 0.0
      %559 = vmatpush.msra.mxu0 0.0
      %560 = vmatpush.msra.mxu0 0.0
      %561 = vmatpush.msra.mxu0 0.0
      %562 = vmatpush.msra.mxu0 %v520
      %563 = vmatpush.msra.mxu0 %v518
      %564 = vmatpush.msra.mxu0 %v516
      %565 = vmatmul.f32.gmra.mxu0 %v527
      %v566 = vpop.f32.mrf.mxu0
      %v567 = vadd.f32 %v494, %v566
      %568 = vdwg.mxu0
      %v569 = vld [vmem:[#allocation3 + $0x8] sm:$0xff]
      %v570 = vld [vmem:[#allocation3 + $0x10] sm:$0xff]
      %v571 = vld [vmem:[#allocation3 + $0x18] sm:$0xff]
      %v572 = vld [vmem:[#allocation2 + $0x8] sm:$0xff]
      %v573 = vld [vmem:[#allocation2 + $0x10] sm:$0xff]
      %v574 = vld [vmem:[#allocation2 + $0x18] sm:$0xff]
      %578 = vrot.lane.b32.xlu0 %v572, 127
      %v579 = vpop.permute.xlu0 %578
      %580 = vrot.lane.b32.xlu0 %v573, 127
      %v581 = vpop.permute.xlu0 %580
      %582 = vrot.lane.b32.xlu0 %v574, 127
      %v583 = vpop.permute.xlu0 %582
      %v584 = vsel %vm386, %v579, %v581
      %v585 = vsel %vm386, %v581, %v583
      %586 = vrot.lane.b32.xlu0 %v401, 80
      %v587 = vpop.permute.xlu0 %586
      %591 = vrot.lane.b32.xlu0 %v569, 113
      %v592 = vpop.permute.xlu0 %591
      %593 = vrot.lane.b32.xlu0 %v570, 113
      %v594 = vpop.permute.xlu0 %593
      %595 = vrot.lane.b32.xlu0 %v571, 113
      %v596 = vpop.permute.xlu0 %595
      %597 = vrot.lane.b32.xlu0 %v584, 113
      %v598 = vpop.permute.xlu0 %597
      %599 = vrot.lane.b32.xlu0 %v585, 113
      %v600 = vpop.permute.xlu0 %599
      %601 = vrot.lane.b32.xlu0 %v583, 113
      %v602 = vpop.permute.xlu0 %601
      %603 = vrot.lane.b32.xlu0 %v414, 113
      %v604 = vpop.permute.xlu0 %603
      %605 = vrot.lane.b32.xlu0 %v415, 113
      %v606 = vpop.permute.xlu0 %605
      %607 = vrot.lane.b32.xlu0 %v413, 113
      %v608 = vpop.permute.xlu0 %607
      %vm609 = vcmask 924672
      %v610 = vsel %vm609, %v592, %v594
      %v611 = vsel %vm609, %v594, %v596
      %v612 = vsel %vm609, %v598, %v600
      %v613 = vsel %vm609, %v600, %v602
      %v614 = vsel %vm609, %v604, %v606
      %v615 = vsel %vm609, %v606, %v608
      %v622 = vsel %vm453, %v587, 0
      %624 = vmatpush.msra.mxu0 0.0
      %625 = vmatpush.msra.mxu0 0.0
      %626 = vmatpush.msra.mxu0 0.0
      %627 = vmatpush.msra.mxu0 0.0
      %628 = vmatpush.msra.mxu0 0.0
      %629 = vmatpush.msra.mxu0 0.0
      %630 = vmatpush.msra.mxu0 0.0
      %631 = vmatpush.msra.mxu0 0.0
      %632 = vmatpush.msra.mxu0 0.0
      %633 = vmatpush.msra.mxu0 0.0
      %634 = vmatpush.msra.mxu0 0.0
      %635 = vmatpush.msra.mxu0 0.0
      %636 = vmatpush.msra.mxu0 0.0
      %637 = vmatpush.msra.mxu0 %v614
      %638 = vmatpush.msra.mxu0 %v612
      %639 = vmatpush.msra.mxu0 %v610
      %640 = vmatmul.f32.gmra.mxu0 %v622
      %v641 = vpop.f32.mrf.mxu0
      %v642 = vadd.f32 0.0, %v641
      %643 = vdwg.mxu0
      %644 = vmatpush.msra.mxu0 0.0
      %645 = vmatpush.msra.mxu0 0.0
      %646 = vmatpush.msra.mxu0 0.0
      %647 = vmatpush.msra.mxu0 0.0
      %648 = vmatpush.msra.mxu0 0.0
      %649 = vmatpush.msra.mxu0 0.0
      %650 = vmatpush.msra.mxu0 0.0
      %651 = vmatpush.msra.mxu0 0.0
      %652 = vmatpush.msra.mxu0 0.0
      %653 = vmatpush.msra.mxu0 0.0
      %654 = vmatpush.msra.mxu0 0.0
      %655 = vmatpush.msra.mxu0 0.0
      %656 = vmatpush.msra.mxu0 0.0
      %657 = vmatpush.msra.mxu0 %v615
      %658 = vmatpush.msra.mxu0 %v613
      %659 = vmatpush.msra.mxu0 %v611
      %660 = vmatmul.f32.gmra.mxu0 %v622
      %v661 = vpop.f32.mrf.mxu0
      %v662 = vadd.f32 0.0, %v661
      %663 = vdwg.mxu0
      %v664 = vadd.f32 %v547, %v642
      %v665 = vadd.f32 %v567, %v662
      %v666 = vld [vmem:[%s3] sm:$0xf]
      %668 = vset.pattern.permute.xlu0 0
      %669 = vperm.xlu0 %668, %v666
      %v670 = vpop.permute.xlu0 %669
      %v672 = vadd.f32 %v664, %v670
      %v673 = vadd.f32 %v665, %v670
      %v676 = vrot.slane %v673, 4
      %vm677 = vcmask 1043456
      %v678 = vsel %vm677, %v672, %v676
      %680 = vst [vmem:[%s251] sm:$0xff] %v678
      %v681 = vsel %vm677, %v664, 0.0
      %v682 = vsel %vm677, %v665, 0.0
      %v683 = vadd.f32 %v681, %v682
      %684 = vadd.xlane.f32.xlu0 %v683
      %v685 = vpop.xlane.xlu0 %684
      %v686 = vmul.f32 %v664, %v664
      %v687 = vmul.f32 %v665, %v665
      %v688 = vsel %vm677, %v686, 0.0
      %v689 = vsel %vm677, %v687, 0.0
      %v690 = vadd.f32 %v688, %v689
      %691 = vadd.xlane.f32.xlu0 %v690
      %v692 = vpop.xlane.xlu0 %691
      %v693 = vsel %vm440, %v685, %v692
      %vm694 = vcmask 11264
      %695 = vst.msk [vmem:[%s255] sm:$0xf] %vm694, %v693
      %p696 = scmp.lt.s32.totalorder %s17, 1
      %s697 = scalar_select %p696, %s17, 1
      %s698 = smul.addr %s697, 2
      %s699 = smul.addr %s698, 4
      %s700 = scalar_lea.vmem %s4, %s699
      %p701 = scmp.lt.s32.totalorder %s17, 1
      %s702 = scalar_select %p701, %s17, 1
      %s703 = smul.addr %s702, 4
      %s704 = scalar_lea.vmem %s5, %s703
      // Predicated region
      $region37: #{up_forward.3} parent=35 // pred_check
        %p705 = pneg %p129
      $region38: #{up_forward.3} parent=35 // pred_check_branch
        %707 = sbr.rel (%p705) target = $region40
      $region39: #{up_forward.3} parent=35 // pred_region
        _
      $region40: #{up_forward.3} parent=35 // pred_fallthru
        _
      // Predicated region
      $region41: #{up_forward.3} parent=35 // pred_check
        %p708 = pneg %p155
      $region42: #{up_forward.3} parent=35 // pred_check_branch
        %710 = sbr.rel (%p708) target = $region44
      $region43: #{up_forward.3} parent=35 // pred_region
        _
      $region44: #{up_forward.3} parent=35 // pred_fallthru
        _
    $region36: #{up_forward.3} parent=5 // pred_fallthru
      _
    %p711 = scmp.le.s32.totalorder 2, %s12
    // Predicated region
    $region45: #{up_forward.3} parent=5 // pred_check
      %p712 = pneg %p711
    $region46: #{up_forward.3} parent=5 // pred_check_branch
      %714 = sbr.rel (%p712) target = $region48
    $region47: #{up_forward.3} parent=5 // pred_region
      %s715 = ssub.s32 %s12, 2
      // Predicated region
      $region49: #{up_forward.3} parent=47 // pred_check
        %p716 = pneg %p135
      $region50: #{up_forward.3} parent=47 // pred_check_branch
        %718 = sbr.rel (%p716) target = $region52
      $region51: #{up_forward.3} parent=47 // pred_region
        %p719 = scmp.lt.s32.totalorder %s18, 1
        %s720 = scalar_select %p719, %s18, 1
        %s721 = smul.addr %s720, 2
        %s722 = smul.addr %s721, 4
        %s723 = scalar_lea.vmem %s4, %s722
      $region52: #{up_forward.3} parent=47 // pred_fallthru
        _
      // Predicated region
      $region53: #{up_forward.3} parent=47 // pred_check
        %p724 = pneg %p161
      $region54: #{up_forward.3} parent=47 // pred_check_branch
        %726 = sbr.rel (%p724) target = $region56
      $region55: #{up_forward.3} parent=47 // pred_region
        %p727 = scmp.lt.s32.totalorder %s18, 1
        %s728 = scalar_select %p727, %s18, 1
        %s729 = smul.addr %s728, 4
        %s730 = scalar_lea.vmem %s5, %s729
      $region56: #{up_forward.3} parent=47 // pred_fallthru
        _
    $region48: #{up_forward.3} parent=5 // pred_fallthru
      _
  $region6: #{up_forward.3} parent=0 // loop_footer
    %s16 = sadd.s32 1, %s12
  $region7: #{up_forward.3} parent=0 // loop_footer_branch
    %11 = sbr.rel target = $region3
  $region8: #{up_forward.3} parent=0 // loop_exit
    _

// kernel: up_forward.4
$region0: #{up_forward.4}
  #allocation0 [shape = 'u32[]', space=smem, size = 0x4, offset = 0x4, fixed_abs, tag = 'smem constant byte address 0x4 - core index']
  #allocation1 [shape = 'u32[72,128]{1,0:T(1,128)}', space=vmem, size = 0x9000, scoped, tag = 'internal scratch']
  #allocation2 [shape = 'f32[8,512]{1,0:T(8,128)}', space=vmem, size = 0x4000, scoped, tag = 'scratch operand']
  #allocation3 [shape = 'f32[8,512]{1,0:T(8,128)}', space=vmem, size = 0x4000, scoped, tag = 'scratch operand']
  #allocation4 [shape = 'f32[8,512]{1,0:T(8,128)}', space=vmem, size = 0x4000, scoped, tag = 'scratch operand']
  %s0 = inlined_call_operand.vmem [shape: f32[2,4,256], index: 0, kind: input, shape index: {}]
  %s1 = inlined_call_operand.vmem [shape: f32[4,1], index: 1, kind: input, shape index: {}]
  %s2 = inlined_call_operand.vmem [shape: f32[4,1], index: 2, kind: input, shape index: {}]
  %s3 = inlined_call_operand.vmem [shape: f32[4,72], index: 3, kind: input, shape index: {}]
  %s4 = inlined_call_operand.vmem [shape: f32[4,1], index: 4, kind: input, shape index: {}]
  %s5 = inlined_call_operand.vmem [shape: f32[2,4,256], index: 5, kind: output, shape index: {0}]
  %s6 = inlined_call_operand.vmem [shape: f32[2,4,2], index: 6, kind: output, shape index: {1}]
  %7 = xla_tuple %s5, %s6
  %s8 = sld [smem:[#allocation0]]
  $region61: #{up_forward.4} parent=0
    _
  %s10 = ssub.s32 1, %s8
  %s11 = scalar_select 0, %s10, %s8
  loop: start=0, step=1, limit=4
  $region2: #{up_forward.4} parent=0 // loop_pre_header
    _
  $region3: #{up_forward.4} parent=0 // loop_header
    %s13 = sphi 0, %s17
    %p14 = scmp.ge.s32.totalorder %s13, 4
    %s23 = sphi 0, %s25
    %s26 = sphi 0, %s23
    %s27 = sphi 0, %s26
    %s43 = sphi 0, %s27
    %s47 = sphi 0, %s47
    %s49 = sphi 0, %s47
    %s50 = sphi 0, %s49
    %s64 = sphi 0, %s50
    %s68 = sphi 0, %s68
    %s70 = sphi 0, %s68
    %s71 = sphi 0, %s70
    %s85 = sphi 0, %s71
    %s89 = sphi 0, %s89
    %s91 = sphi 0, %s89
    %s92 = sphi 0, %s91
    %s106 = sphi 0, %s92
    %s110 = sphi 0, %s110
    %s112 = sphi 0, %s110
    %s113 = sphi 0, %s112
    %s127 = sphi 0, %s113
    %s133 = sphi 0, %s135
    %s136 = sphi 0, %s133
    %s137 = sphi 0, %s136
    %s153 = sphi 0, %s137
    %s159 = sphi 0, %s161
    %s162 = sphi 0, %s159
    %s163 = sphi 0, %s162
    %s179 = sphi 0, %s163
  $region4: #{up_forward.4} parent=0 // loop_header_branch
    %16 = sbr.rel (%p14) target = $region8
  $region5: #{up_forward.4} parent=0 // loop_body
    %s18 = ssub.s32 %s13, 1
    %s19 = ssub.s32 %s13, 2
    %s20 = sadd.s32 %s13, 1
    %s21 = ssub.s32 %s13, %s20
    %p22 = scmp.eq.s32.totalorder %s21, 0
    %s24 = sadd.s32 %s23, 1
    %s25 = scalar_select %p22, %s23, %s24
    %p28 = pneg %p22
    %p29 = scmp.eq.s32.totalorder %s13, 1
    %p30 = por %p28, %p29
    %p31 = scmp.ne.s32.totalorder %s23, %s26
    %p32 = scmp.eq.s32.totalorder %s13, 0
    %p33 = por %p31, %p32
    %p34 = scmp.ne.s32.totalorder %s23, %s26
    %p35 = scmp.eq.s32.totalorder %s18, 1
    %p36 = por %p34, %p35
    %p37 = scmp.ne.s32.totalorder %s26, %s27
    %p38 = scmp.eq.s32.totalorder %s18, 0
    %p39 = por %p37, %p38
    %p40 = scmp.ne.s32.totalorder %s26, %s27
    %p41 = scmp.eq.s32.totalorder %s19, 1
    %p42 = por %p40, %p41
    %p44 = scmp.ne.s32.totalorder %s27, %s43
    %p45 = scmp.eq.s32.totalorder %s19, 0
    %p46 = por %p44, %p45
    %s48 = sadd.s32 %s47, 1
    %p51 = scmp.eq.s32.totalorder %s13, 1
    %p52 = scmp.ne.s32.totalorder %s47, %s49
    %p53 = scmp.eq.s32.totalorder %s13, 0
    %p54 = por %p52, %p53
    %p55 = scmp.ne.s32.totalorder %s47, %s49
    %p56 = scmp.eq.s32.totalorder %s18, 1
    %p57 = por %p55, %p56
    %p58 = scmp.ne.s32.totalorder %s49, %s50
    %p59 = scmp.eq.s32.totalorder %s18, 0
    %p60 = por %p58, %p59
    %p61 = scmp.ne.s32.totalorder %s49, %s50
    %p62 = scmp.eq.s32.totalorder %s19, 1
    %p63 = por %p61, %p62
    %p65 = scmp.ne.s32.totalorder %s50, %s64
    %p66 = scmp.eq.s32.totalorder %s19, 0
    %p67 = por %p65, %p66
    %s69 = sadd.s32 %s68, 1
    %p72 = scmp.eq.s32.totalorder %s13, 1
    %p73 = scmp.ne.s32.totalorder %s68, %s70
    %p74 = scmp.eq.s32.totalorder %s13, 0
    %p75 = por %p73, %p74
    %p76 = scmp.ne.s32.totalorder %s68, %s70
    %p77 = scmp.eq.s32.totalorder %s18, 1
    %p78 = por %p76, %p77
    %p79 = scmp.ne.s32.totalorder %s70, %s71
    %p80 = scmp.eq.s32.totalorder %s18, 0
    %p81 = por %p79, %p80
    %p82 = scmp.ne.s32.totalorder %s70, %s71
    %p83 = scmp.eq.s32.totalorder %s19, 1
    %p84 = por %p82, %p83
    %p86 = scmp.ne.s32.totalorder %s71, %s85
    %p87 = scmp.eq.s32.totalorder %s19, 0
    %p88 = por %p86, %p87
    %s90 = sadd.s32 %s89, 1
    %p93 = scmp.eq.s32.totalorder %s13, 1
    %p94 = scmp.ne.s32.totalorder %s89, %s91
    %p95 = scmp.eq.s32.totalorder %s13, 0
    %p96 = por %p94, %p95
    %p97 = scmp.ne.s32.totalorder %s89, %s91
    %p98 = scmp.eq.s32.totalorder %s18, 1
    %p99 = por %p97, %p98
    %p100 = scmp.ne.s32.totalorder %s91, %s92
    %p101 = scmp.eq.s32.totalorder %s18, 0
    %p102 = por %p100, %p101
    %p103 = scmp.ne.s32.totalorder %s91, %s92
    %p104 = scmp.eq.s32.totalorder %s19, 1
    %p105 = por %p103, %p104
    %p107 = scmp.ne.s32.totalorder %s92, %s106
    %p108 = scmp.eq.s32.totalorder %s19, 0
    %p109 = por %p107, %p108
    %s111 = sadd.s32 %s110, 1
    %p114 = scmp.eq.s32.totalorder %s13, 1
    %p115 = scmp.ne.s32.totalorder %s110, %s112
    %p116 = scmp.eq.s32.totalorder %s13, 0
    %p117 = por %p115, %p116
    %p118 = scmp.ne.s32.totalorder %s110, %s112
    %p119 = scmp.eq.s32.totalorder %s18, 1
    %p120 = por %p118, %p119
    %p121 = scmp.ne.s32.totalorder %s112, %s113
    %p122 = scmp.eq.s32.totalorder %s18, 0
    %p123 = por %p121, %p122
    %p124 = scmp.ne.s32.totalorder %s112, %s113
    %p125 = scmp.eq.s32.totalorder %s19, 1
    %p126 = por %p124, %p125
    %p128 = scmp.ne.s32.totalorder %s113, %s127
    %p129 = scmp.eq.s32.totalorder %s19, 0
    %p130 = por %p128, %p129
    %s131 = ssub.s32 %s13, %s20
    %p132 = scmp.eq.s32.totalorder %s131, 0
    %s134 = sadd.s32 %s133, 1
    %s135 = scalar_select %p132, %s133, %s134
    %p138 = pneg %p132
    %p139 = scmp.eq.s32.totalorder %s13, 1
    %p140 = por %p138, %p139
    %p141 = scmp.ne.s32.totalorder %s133, %s136
    %p142 = scmp.eq.s32.totalorder %s13, 0
    %p143 = por %p141, %p142
    %p144 = scmp.ne.s32.totalorder %s133, %s136
    %p145 = scmp.eq.s32.totalorder %s18, 1
    %p146 = por %p144, %p145
    %p147 = scmp.ne.s32.totalorder %s136, %s137
    %p148 = scmp.eq.s32.totalorder %s18, 0
    %p149 = por %p147, %p148
    %p150 = scmp.ne.s32.totalorder %s136, %s137
    %p151 = scmp.eq.s32.totalorder %s19, 1
    %p152 = por %p150, %p151
    %p154 = scmp.ne.s32.totalorder %s137, %s153
    %p155 = scmp.eq.s32.totalorder %s19, 0
    %p156 = por %p154, %p155
    %s157 = ssub.s32 %s13, %s20
    %p158 = scmp.eq.s32.totalorder %s157, 0
    %s160 = sadd.s32 %s159, 1
    %s161 = scalar_select %p158, %s159, %s160
    %p164 = pneg %p158
    %p165 = scmp.eq.s32.totalorder %s13, 1
    %p166 = por %p164, %p165
    %p167 = scmp.ne.s32.totalorder %s159, %s162
    %p168 = scmp.eq.s32.totalorder %s13, 0
    %p169 = por %p167, %p168
    %p170 = scmp.ne.s32.totalorder %s159, %s162
    %p171 = scmp.eq.s32.totalorder %s18, 1
    %p172 = por %p170, %p171
    %p173 = scmp.ne.s32.totalorder %s162, %s163
    %p174 = scmp.eq.s32.totalorder %s18, 0
    %p175 = por %p173, %p174
    %p176 = scmp.ne.s32.totalorder %s162, %s163
    %p177 = scmp.eq.s32.totalorder %s19, 1
    %p178 = por %p176, %p177
    %p180 = scmp.ne.s32.totalorder %s163, %s179
    %p181 = scmp.eq.s32.totalorder %s19, 0
    %p182 = por %p180, %p181
    %p183 = scmp.le.s32.totalorder 1, %s13
    %p184 = scmp.lt.s32.totalorder %s13, 3
    %p185 = pnand %p183, %p184
    %p186 = pneg %p185
    // Predicated region
    $region9: #{up_forward.4} parent=5 // pred_check
      _
    $region10: #{up_forward.4} parent=5 // pred_check_branch
      %188 = sbr.rel (%p185) target = $region12
    $region11: #{up_forward.4} parent=5 // pred_region
      %s189 = ssub.s32 %s13, 1
      // Predicated region
      $region13: #{up_forward.4} parent=11 // pred_check
        %p190 = pneg %p60
      $region14: #{up_forward.4} parent=11 // pred_check_branch
        %192 = sbr.rel (%p190) target = $region16
      $region15: #{up_forward.4} parent=11 // pred_region
        _
      $region16: #{up_forward.4} parent=11 // pred_fallthru
        _
      // Predicated region
      $region17: #{up_forward.4} parent=11 // pred_check
        %p193 = pneg %p81
      $region18: #{up_forward.4} parent=11 // pred_check_branch
        %195 = sbr.rel (%p193) target = $region20
      $region19: #{up_forward.4} parent=11 // pred_region
        _
      $region20: #{up_forward.4} parent=11 // pred_fallthru
        _
      // Predicated region
      $region21: #{up_forward.4} parent=11 // pred_check
        %p196 = pneg %p102
      $region22: #{up_forward.4} parent=11 // pred_check_branch
        %198 = sbr.rel (%p196) target = $region24
      $region23: #{up_forward.4} parent=11 // pred_region
        _
      $region24: #{up_forward.4} parent=11 // pred_fallthru
        _
      // Predicated region
      $region25: #{up_forward.4} parent=11 // pred_check
        %p199 = pneg %p123
      $region26: #{up_forward.4} parent=11 // pred_check_branch
        %201 = sbr.rel (%p199) target = $region28
      $region27: #{up_forward.4} parent=11 // pred_region
        _
      $region28: #{up_forward.4} parent=11 // pred_fallthru
        _
    $region12: #{up_forward.4} parent=5 // pred_fallthru
      _
    %p202 = scmp.lt.s32.totalorder %s13, 2
    // Predicated region
    $region29: #{up_forward.4} parent=5 // pred_check
      %p203 = pneg %p202
    $region30: #{up_forward.4} parent=5 // pred_check_branch
      %205 = sbr.rel (%p203) target = $region32
    $region31: #{up_forward.4} parent=5 // pred_region
      // Predicated region
      $region33: #{up_forward.4} parent=31 // pred_check
        %p206 = pneg %p33
      $region34: #{up_forward.4} parent=31 // pred_check_branch
        %208 = sbr.rel (%p206) target = $region36
      $region35: #{up_forward.4} parent=31 // pred_region
        %p209 = scmp.lt.s32.totalorder %s13, 1
        %s210 = scalar_select %p209, %s13, 1
        %s211 = smul.addr %s210, 2
        %s212 = smul.addr %s211, 4
        %s213 = scalar_lea.vmem %s0, %s212
      $region36: #{up_forward.4} parent=31 // pred_fallthru
        _
    $region32: #{up_forward.4} parent=5 // pred_fallthru
      _
    %p214 = scmp.le.s32.totalorder 1, %s13
    %p215 = scmp.lt.s32.totalorder %s13, 3
    %p216 = pnand %p214, %p215
    %p217 = pneg %p216
    // Predicated region
    $region37: #{up_forward.4} parent=5 // pred_check
      _
    $region38: #{up_forward.4} parent=5 // pred_check_branch
      %219 = sbr.rel (%p216) target = $region40
    $region39: #{up_forward.4} parent=5 // pred_region
      %s220 = ssub.s32 %s13, 1
      %p221 = scmp.lt.s32.totalorder %s18, 1
      %s222 = scalar_select %p221, %s18, 1
      %s223 = smul.addr %s222, 2
      %s224 = smul.addr %s223, 4
      %s225 = scalar_lea.vmem %s0, %s224
      %p226 = pneg %p39
      %p227 = pneg %p36
      %p228 = pneg %p60
      %p229 = pneg %p57
      %p230 = pneg %p81
      %p231 = pneg %p78
      %p232 = pneg %p102
      %p233 = pneg %p99
      %p234 = pneg %p123
      %p235 = pneg %p120
      %p236 = pneg %p149
      %p237 = pneg %p146
      %p238 = scmp.lt.s32.totalorder %s18, 1
      %s239 = scalar_select %p238, %s18, 1
      %s240 = smul.addr %s239, 2
      %s241 = smul.addr %s240, 4
      %s242 = scalar_lea.vmem %s5, %s241
      %p243 = pneg %p175
      %p244 = pneg %p172
      %p245 = scmp.lt.s32.totalorder %s18, 1
      %s246 = scalar_select %p245, %s18, 1
      %s247 = smul.addr %s246, 4
      %s248 = scalar_lea.vmem %s6, %s247
      %p249 = scmp.lt.s32.totalorder %s18, 1
      %s250 = scalar_select %p249, %s18, 1
      %s251 = smul.addr %s250, 2
      %s252 = smul.addr %s251, 4
      %s253 = scalar_lea.vmem %s0, %s252
      %p254 = scmp.lt.s32.totalorder %s18, 1
      %s255 = scalar_select %p254, %s18, 1
      %s256 = smul.addr %s255, 2
      %s257 = smul.addr %s256, 4
      %s258 = scalar_lea.vmem %s5, %s257
      %p259 = scmp.lt.s32.totalorder %s18, 1
      %s260 = scalar_select %p259, %s18, 1
      %s261 = smul.addr %s260, 4
      %s262 = scalar_lea.vmem %s6, %s261
      %v263 = vld [vmem:[%s253] sm:$0xff]
      %v264 = vld [vmem:[%s1] sm:$0xf]
      %266 = vset.pattern.permute.xlu0 0
      %267 = vperm.xlu0 %266, %v264
      %v268 = vpop.permute.xlu0 %267
      %v270 = vunpack.c.l.s4 839922192
      %v271 = vunpack.c.0.s8 %v270
      %v272 = vperm.slane %v268, %v271
      %v274 = vmul.f32 %v263, %v272
      %v275 = vld [vmem:[%s2] sm:$0xf]
      %277 = vset.pattern.permute.xlu0 0
      %278 = vperm.xlu0 %277, %v275
      %v279 = vpop.permute.xlu0 %278
      %v281 = vunpack.c.l.s4 839922192
      %v282 = vunpack.c.0.s8 %v281
      %v283 = vperm.slane %v279, %v282
      %v285 = vadd.f32 %v274, %v283
      %v286 = vmax.f32 %v285, 0.0
      %287 = vst [vmem:[#allocation2] sm:$0xff] 0.0
      %288 = vst [vmem:[#allocation2 + $0x18] sm:$0xff] 0.0
      %289 = vst [vmem:[#allocation2 + $0x8] sm:$0xf0] 0.0
      %290 = vst [vmem:[#allocation2 + $0x10] sm:$0xf0] 0.0
      %291 = vst [vmem:[#allocation3] sm:$0xff] 0.0
      %292 = vst [vmem:[#allocation3 + $0x18] sm:$0xff] 0.0
      %293 = vst [vmem:[#allocation3 + $0x8] sm:$0xf0] 0.0
      %294 = vst [vmem:[#allocation3 + $0x10] sm:$0xf0] 0.0
      %295 = vst [vmem:[#allocation4] sm:$0xff] 0.0
      %296 = vst [vmem:[#allocation4 + $0x18] sm:$0xff] 0.0
      %297 = vst [vmem:[#allocation4 + $0x8] sm:$0xf0] 0.0
      %298 = vst [vmem:[#allocation4 + $0x10] sm:$0xf0] 0.0
      %v299 = vlaneseq
      %v300 = vand.u32 %v299, 127
      %v301 = vadd.s32 %v300, 128
      %vm302 = vcmp.lt.s32.totalorder %v300, 0
      %v303 = vsub.s32 0, %v300
      %v304 = vsel %vm302, %v303, %v300
      %v305 = vshrl.u32 %v304, 4
      %v306 = vand.u32 %v304, 15
      %v307 = vsub.s32 0, %v306
      %v308 = vsel %vm302, %v307, %v306
      %vm309 = vcmp.lt.s32.totalorder %v301, 0
      %v310 = vsub.s32 0, %v301
      %v311 = vsel %vm309, %v310, %v301
      %v312 = vshrl.u32 %v311, 4
      %v313 = vand.u32 %v311, 15
      %v314 = vsub.s32 0, %v313
      %v315 = vsel %vm309, %v314, %v313
      %vm316 = vcmp.ne.s32.totalorder %v308, 0
      %vm317 = vcmp.ne.s32.totalorder %v315, 0
      %vm318 = vcmp.lt.s32.totalorder %v308, 0
      %vm319 = vcmp.lt.s32.totalorder %v315, 0
      %vm320 = vmand %vm318, %vm316
      %vm321 = vmand %vm319, %vm317
      %v322 = vadd.s32 %v308, 16
      %v323 = vadd.s32 %v315, 16
      %v324 = vsel %vm320, %v322, %v308
      %v325 = vsel %vm321, %v323, %v315
      %327 = vst [vmem:[#allocation1] ss:$2 sm:$0xff] %v286
      %v328 = vld.sshfl [vmem:[#allocation1] sm:$0xff pattern:$0x75316420]
      %v329 = vld.sshfl [vmem:[#allocation1 + $0x8] sm:$0xff pattern:$0x75316420]
      %332 = vst [vmem:[#allocation2 + $0x8] sm:$0xf] %v328
      %333 = vst [vmem:[#allocation2 + $0x10] sm:$0xf] %v329
      %vm334 = vcmp.ne.s32.totalorder %v324, 15
      %vm335 = vcmp.ne.s32.totalorder %v325, 15
      %v336 = vsel %vm334, 1, 0
      %v337 = vsel %vm335, 1, 0
      %vm338 = vcmp.eq.s32.totalorder %v336, 1
      %vm339 = vcmp.eq.s32.totalorder %v337, 1
      %340 = vst [vmem:[#allocation1] ss:$2 sm:$0xff] %v286
      %v341 = vld.sshfl [vmem:[#allocation1] sm:$0xff pattern:$0x75316420]
      %v342 = vld.sshfl [vmem:[#allocation1 + $0x8] sm:$0xff pattern:$0x75316420]
      %v345 = vsel %vm338, %v341, 0.0
      %v346 = vsel %vm339, %v342, 0.0
      %347 = vst [vmem:[#allocation3 + $0x8] sm:$0xf] %v345
      %348 = vst [vmem:[#allocation3 + $0x10] sm:$0xf] %v346
      %vm349 = vcmp.ne.s32.totalorder %v324, 0
      %vm350 = vcmp.ne.s32.totalorder %v325, 0
      %v351 = vsel %vm349, 1, 0
      %v352 = vsel %vm350, 1, 0
      %vm353 = vcmp.eq.s32.totalorder %v351, 1
      %vm354 = vcmp.eq.s32.totalorder %v352, 1
      %355 = vst [vmem:[#allocation1] ss:$2 sm:$0xff] %v286
      %v356 = vld.sshfl [vmem:[#allocation1] sm:$0xff pattern:$0x75316420]
      %v357 = vld.sshfl [vmem:[#allocation1 + $0x8] sm:$0xff pattern:$0x75316420]
      %v360 = vsel %vm353, %v356, 0.0
      %v361 = vsel %vm354, %v357, 0.0
      %362 = vst [vmem:[#allocation4 + $0x8] sm:$0xf] %v360
      %363 = vst [vmem:[#allocation4 + $0x10] sm:$0xf] %v361
      %v364 = vld [vmem:[#allocation3] sm:$0xff]
      %v365 = vld [vmem:[#allocation3 + $0x8] sm:$0xff]
      %v366 = vld [vmem:[#allocation3 + $0x10] sm:$0xff]
      %v367 = vld [vmem:[#allocation2] sm:$0xff]
      %v368 = vld [vmem:[#allocation2 + $0x8] sm:$0xff]
      %v369 = vld [vmem:[#allocation2 + $0x10] sm:$0xff]
      %v370 = vld [vmem:[#allocation4] sm:$0xff]
      %v371 = vld [vmem:[#allocation4 + $0x8] sm:$0xff]
      %v372 = vld [vmem:[#allocation4 + $0x10] sm:$0xff]
      %376 = vrot.lane.b32.xlu0 %v367, 127
      %v377 = vpop.permute.xlu0 %376
      %378 = vrot.lane.b32.xlu0 %v368, 127
      %v379 = vpop.permute.xlu0 %378
      %380 = vrot.lane.b32.xlu0 %v369, 127
      %v381 = vpop.permute.xlu0 %380
      %vm382 = vcmask 1039360
      %v383 = vsel %vm382, %v377, %v379
      %v384 = vsel %vm382, %v379, %v381
      %388 = vrot.lane.b32.xlu0 %v370, 126
      %v389 = vpop.permute.xlu0 %388
      %390 = vrot.lane.b32.xlu0 %v371, 126
      %v391 = vpop.permute.xlu0 %390
      %392 = vrot.lane.b32.xlu0 %v372, 126
      %v393 = vpop.permute.xlu0 %392
      %vm394 = vcmask 1031168
      %v395 = vsel %vm394, %v389, %v391
      %v396 = vsel %vm394, %v391, %v393
      %v397 = vld [vmem:[%s3] sm:$0xf]
      %v398 = vld [vmem:[#allocation4 + $0x8] sm:$0xff]
      %v399 = vld [vmem:[#allocation4 + $0x10] sm:$0xff]
      %v400 = vld [vmem:[#allocation4 + $0x18] sm:$0xff]
      %404 = vrot.lane.b32.xlu0 %v398, 126
      %v405 = vpop.permute.xlu0 %404
      %406 = vrot.lane.b32.xlu0 %v399, 126
      %v407 = vpop.permute.xlu0 %406
      %408 = vrot.lane.b32.xlu0 %v400, 126
      %v409 = vpop.permute.xlu0 %408
      %v410 = vsel %vm394, %v405, %v407
      %v411 = vsel %vm394, %v407, %v409
      %413 = vrot.lane.b32.xlu0 %v397, 104
      %v414 = vpop.permute.xlu0 %413
      %418 = vrot.lane.b32.xlu0 %v364, 1
      %v419 = vpop.permute.xlu0 %418
      %420 = vrot.lane.b32.xlu0 %v365, 1
      %v421 = vpop.permute.xlu0 %420
      %422 = vrot.lane.b32.xlu0 %v366, 1
      %v423 = vpop.permute.xlu0 %422
      %424 = vrot.lane.b32.xlu0 %v379, 1
      %v425 = vpop.permute.xlu0 %424
      %426 = vrot.lane.b32.xlu0 %v384, 1
      %v427 = vpop.permute.xlu0 %426
      %428 = vrot.lane.b32.xlu0 %v381, 1
      %v429 = vpop.permute.xlu0 %428
      %430 = vrot.lane.b32.xlu0 %v405, 1
      %v431 = vpop.permute.xlu0 %430
      %432 = vrot.lane.b32.xlu0 %v410, 1
      %v433 = vpop.permute.xlu0 %432
      %434 = vrot.lane.b32.xlu0 %v411, 1
      %v435 = vpop.permute.xlu0 %434
      %vm436 = vcmask 7168
      %v437 = vsel %vm436, %v419, %v421
      %v438 = vsel %vm436, %v421, %v423
      %v439 = vsel %vm436, %v425, %v427
      %v440 = vsel %vm436, %v427, %v429
      %v441 = vsel %vm436, %v431, %v433
      %v442 = vsel %vm436, %v433, %v435
      %vm449 = vcmask 195584
      %v450 = vsel %vm449, %v414, 0
      %452 = vmatpush.msra.mxu0 0.0
      %453 = vmatpush.msra.mxu0 0.0
      %454 = vmatpush.msra.mxu0 0.0
      %455 = vmatpush.msra.mxu0 0.0
      %456 = vmatpush.msra.mxu0 0.0
      %457 = vmatpush.msra.mxu0 0.0
      %458 = vmatpush.msra.mxu0 0.0
      %459 = vmatpush.msra.mxu0 0.0
      %460 = vmatpush.msra.mxu0 0.0
      %461 = vmatpush.msra.mxu0 0.0
      %462 = vmatpush.msra.mxu0 0.0
      %463 = vmatpush.msra.mxu0 0.0
      %464 = vmatpush.msra.mxu0 0.0
      %465 = vmatpush.msra.mxu0 %v441
      %466 = vmatpush.msra.mxu0 %v439
      %467 = vmatpush.msra.mxu0 %v437
      %468 = vmatmul.f32.gmra.mxu0 %v450
      %v469 = vpop.f32.mrf.mxu0
      %v470 = vadd.f32 0.0, %v469
      %471 = vdwg.mxu0
      %472 = vmatpush.msra.mxu0 0.0
      %473 = vmatpush.msra.mxu0 0.0
      %474 = vmatpush.msra.mxu0 0.0
      %475 = vmatpush.msra.mxu0 0.0
      %476 = vmatpush.msra.mxu0 0.0
      %477 = vmatpush.msra.mxu0 0.0
      %478 = vmatpush.msra.mxu0 0.0
      %479 = vmatpush.msra.mxu0 0.0
      %480 = vmatpush.msra.mxu0 0.0
      %481 = vmatpush.msra.mxu0 0.0
      %482 = vmatpush.msra.mxu0 0.0
      %483 = vmatpush.msra.mxu0 0.0
      %484 = vmatpush.msra.mxu0 0.0
      %485 = vmatpush.msra.mxu0 %v442
      %486 = vmatpush.msra.mxu0 %v440
      %487 = vmatpush.msra.mxu0 %v438
      %488 = vmatmul.f32.gmra.mxu0 %v450
      %v489 = vpop.f32.mrf.mxu0
      %v490 = vadd.f32 0.0, %v489
      %491 = vdwg.mxu0
      %492 = vrot.lane.b32.xlu0 %v364, 17
      %v493 = vpop.permute.xlu0 %492
      %494 = vrot.lane.b32.xlu0 %v365, 17
      %v495 = vpop.permute.xlu0 %494
      %496 = vrot.lane.b32.xlu0 %v366, 17
      %v497 = vpop.permute.xlu0 %496
      %498 = vrot.lane.b32.xlu0 %v383, 17
      %v499 = vpop.permute.xlu0 %498
      %500 = vrot.lane.b32.xlu0 %v384, 17
      %v501 = vpop.permute.xlu0 %500
      %502 = vrot.lane.b32.xlu0 %v381, 17
      %v503 = vpop.permute.xlu0 %502
      %504 = vrot.lane.b32.xlu0 %v395, 17
      %v505 = vpop.permute.xlu0 %504
      %506 = vrot.lane.b32.xlu0 %v396, 17
      %v507 = vpop.permute.xlu0 %506
      %508 = vrot.lane.b32.xlu0 %v393, 17
      %v509 = vpop.permute.xlu0 %508
      %vm510 = vcmask 138240
      %v511 = vsel %vm510, %v493, %v495
      %v512 = vsel %vm510, %v495, %v497
      %v513 = vsel %vm510, %v499, %v501
      %v514 = vsel %vm510, %v501, %v503
      %v515 = vsel %vm510, %v505, %v507
      %v516 = vsel %vm510, %v507, %v509
      %v523 = vsel %vm449, %v397, 0
      %525 = vmatpush.msra.mxu0 0.0
      %526 = vmatpush.msra.mxu0 0.0
      %527 = vmatpush.msra.mxu0 0.0
      %528 = vmatpush.msra.mxu0 0.0
      %529 = vmatpush.msra.mxu0 0.0
      %530 = vmatpush.msra.mxu0 0.0
      %531 = vmatpush.msra.mxu0 0.0
      %532 = vmatpush.msra.mxu0 0.0
      %533 = vmatpush.msra.mxu0 0.0
      %534 = vmatpush.msra.mxu0 0.0
      %535 = vmatpush.msra.mxu0 0.0
      %536 = vmatpush.msra.mxu0 0.0
      %537 = vmatpush.msra.mxu0 0.0
      %538 = vmatpush.msra.mxu0 %v515
      %539 = vmatpush.msra.mxu0 %v513
      %540 = vmatpush.msra.mxu0 %v511
      %541 = vmatmul.f32.gmra.mxu0 %v523
      %v542 = vpop.f32.mrf.mxu0
      %v543 = vadd.f32 %v470, %v542
      %544 = vdwg.mxu0
      %545 = vmatpush.msra.mxu0 0.0
      %546 = vmatpush.msra.mxu0 0.0
      %547 = vmatpush.msra.mxu0 0.0
      %548 = vmatpush.msra.mxu0 0.0
      %549 = vmatpush.msra.mxu0 0.0
      %550 = vmatpush.msra.mxu0 0.0
      %551 = vmatpush.msra.mxu0 0.0
      %552 = vmatpush.msra.mxu0 0.0
      %553 = vmatpush.msra.mxu0 0.0
      %554 = vmatpush.msra.mxu0 0.0
      %555 = vmatpush.msra.mxu0 0.0
      %556 = vmatpush.msra.mxu0 0.0
      %557 = vmatpush.msra.mxu0 0.0
      %558 = vmatpush.msra.mxu0 %v516
      %559 = vmatpush.msra.mxu0 %v514
      %560 = vmatpush.msra.mxu0 %v512
      %561 = vmatmul.f32.gmra.mxu0 %v523
      %v562 = vpop.f32.mrf.mxu0
      %v563 = vadd.f32 %v490, %v562
      %564 = vdwg.mxu0
      %v565 = vld [vmem:[#allocation3 + $0x8] sm:$0xff]
      %v566 = vld [vmem:[#allocation3 + $0x10] sm:$0xff]
      %v567 = vld [vmem:[#allocation3 + $0x18] sm:$0xff]
      %v568 = vld [vmem:[#allocation2 + $0x8] sm:$0xff]
      %v569 = vld [vmem:[#allocation2 + $0x10] sm:$0xff]
      %v570 = vld [vmem:[#allocation2 + $0x18] sm:$0xff]
      %574 = vrot.lane.b32.xlu0 %v568, 127
      %v575 = vpop.permute.xlu0 %574
      %576 = vrot.lane.b32.xlu0 %v569, 127
      %v577 = vpop.permute.xlu0 %576
      %578 = vrot.lane.b32.xlu0 %v570, 127
      %v579 = vpop.permute.xlu0 %578
      %v580 = vsel %vm382, %v575, %v577
      %v581 = vsel %vm382, %v577, %v579
      %582 = vrot.lane.b32.xlu0 %v397, 80
      %v583 = vpop.permute.xlu0 %582
      %587 = vrot.lane.b32.xlu0 %v565, 113
      %v588 = vpop.permute.xlu0 %587
      %589 = vrot.lane.b32.xlu0 %v566, 113
      %v590 = vpop.permute.xlu0 %589
      %591 = vrot.lane.b32.xlu0 %v567, 113
      %v592 = vpop.permute.xlu0 %591
      %593 = vrot.lane.b32.xlu0 %v580, 113
      %v594 = vpop.permute.xlu0 %593
      %595 = vrot.lane.b32.xlu0 %v581, 113
      %v596 = vpop.permute.xlu0 %595
      %597 = vrot.lane.b32.xlu0 %v579, 113
      %v598 = vpop.permute.xlu0 %597
      %599 = vrot.lane.b32.xlu0 %v410, 113
      %v600 = vpop.permute.xlu0 %599
      %601 = vrot.lane.b32.xlu0 %v411, 113
      %v602 = vpop.permute.xlu0 %601
      %603 = vrot.lane.b32.xlu0 %v409, 113
      %v604 = vpop.permute.xlu0 %603
      %vm605 = vcmask 924672
      %v606 = vsel %vm605, %v588, %v590
      %v607 = vsel %vm605, %v590, %v592
      %v608 = vsel %vm605, %v594, %v596
      %v609 = vsel %vm605, %v596, %v598
      %v610 = vsel %vm605, %v600, %v602
      %v611 = vsel %vm605, %v602, %v604
      %v618 = vsel %vm449, %v583, 0
      %620 = vmatpush.msra.mxu0 0.0
      %621 = vmatpush.msra.mxu0 0.0
      %622 = vmatpush.msra.mxu0 0.0
      %623 = vmatpush.msra.mxu0 0.0
      %624 = vmatpush.msra.mxu0 0.0
      %625 = vmatpush.msra.mxu0 0.0
      %626 = vmatpush.msra.mxu0 0.0
      %627 = vmatpush.msra.mxu0 0.0
      %628 = vmatpush.msra.mxu0 0.0
      %629 = vmatpush.msra.mxu0 0.0
      %630 = vmatpush.msra.mxu0 0.0
      %631 = vmatpush.msra.mxu0 0.0
      %632 = vmatpush.msra.mxu0 0.0
      %633 = vmatpush.msra.mxu0 %v610
      %634 = vmatpush.msra.mxu0 %v608
      %635 = vmatpush.msra.mxu0 %v606
      %636 = vmatmul.f32.gmra.mxu0 %v618
      %v637 = vpop.f32.mrf.mxu0
      %v638 = vadd.f32 0.0, %v637
      %639 = vdwg.mxu0
      %640 = vmatpush.msra.mxu0 0.0
      %641 = vmatpush.msra.mxu0 0.0
      %642 = vmatpush.msra.mxu0 0.0
      %643 = vmatpush.msra.mxu0 0.0
      %644 = vmatpush.msra.mxu0 0.0
      %645 = vmatpush.msra.mxu0 0.0
      %646 = vmatpush.msra.mxu0 0.0
      %647 = vmatpush.msra.mxu0 0.0
      %648 = vmatpush.msra.mxu0 0.0
      %649 = vmatpush.msra.mxu0 0.0
      %650 = vmatpush.msra.mxu0 0.0
      %651 = vmatpush.msra.mxu0 0.0
      %652 = vmatpush.msra.mxu0 0.0
      %653 = vmatpush.msra.mxu0 %v611
      %654 = vmatpush.msra.mxu0 %v609
      %655 = vmatpush.msra.mxu0 %v607
      %656 = vmatmul.f32.gmra.mxu0 %v618
      %v657 = vpop.f32.mrf.mxu0
      %v658 = vadd.f32 0.0, %v657
      %659 = vdwg.mxu0
      %v660 = vadd.f32 %v543, %v638
      %v661 = vadd.f32 %v563, %v658
      %v662 = vld [vmem:[%s4] sm:$0xf]
      %664 = vset.pattern.permute.xlu0 0
      %665 = vperm.xlu0 %664, %v662
      %v666 = vpop.permute.xlu0 %665
      %v668 = vadd.f32 %v660, %v666
      %v669 = vadd.f32 %v661, %v666
      %v672 = vrot.slane %v669, 4
      %vm673 = vcmask 1043456
      %v674 = vsel %vm673, %v668, %v672
      %676 = vst [vmem:[%s258] sm:$0xff] %v674
      %v677 = vsel %vm673, %v660, 0.0
      %v678 = vsel %vm673, %v661, 0.0
      %v679 = vadd.f32 %v677, %v678
      %680 = vadd.xlane.f32.xlu0 %v679
      %v681 = vpop.xlane.xlu0 %680
      %v682 = vmul.f32 %v660, %v660
      %v683 = vmul.f32 %v661, %v661
      %v684 = vsel %vm673, %v682, 0.0
      %v685 = vsel %vm673, %v683, 0.0
      %v686 = vadd.f32 %v684, %v685
      %687 = vadd.xlane.f32.xlu0 %v686
      %v688 = vpop.xlane.xlu0 %687
      %v689 = vsel %vm436, %v681, %v688
      %vm690 = vcmask 11264
      %691 = vst.msk [vmem:[%s262] sm:$0xf] %vm690, %v689
      %p692 = scmp.lt.s32.totalorder %s18, 1
      %s693 = scalar_select %p692, %s18, 1
      %s694 = smul.addr %s693, 2
      %s695 = smul.addr %s694, 4
      %s696 = scalar_lea.vmem %s5, %s695
      %p697 = scmp.lt.s32.totalorder %s18, 1
      %s698 = scalar_select %p697, %s18, 1
      %s699 = smul.addr %s698, 4
      %s700 = scalar_lea.vmem %s6, %s699
      // Predicated region
      $region41: #{up_forward.4} parent=39 // pred_check
        %p701 = pneg %p146
      $region42: #{up_forward.4} parent=39 // pred_check_branch
        %703 = sbr.rel (%p701) target = $region44
      $region43: #{up_forward.4} parent=39 // pred_region
        _
      $region44: #{up_forward.4} parent=39 // pred_fallthru
        _
      // Predicated region
      $region45: #{up_forward.4} parent=39 // pred_check
        %p704 = pneg %p172
      $region46: #{up_forward.4} parent=39 // pred_check_branch
        %706 = sbr.rel (%p704) target = $region48
      $region47: #{up_forward.4} parent=39 // pred_region
        _
      $region48: #{up_forward.4} parent=39 // pred_fallthru
        _
    $region40: #{up_forward.4} parent=5 // pred_fallthru
      _
    %p707 = scmp.le.s32.totalorder 2, %s13
    // Predicated region
    $region49: #{up_forward.4} parent=5 // pred_check
      %p708 = pneg %p707
    $region50: #{up_forward.4} parent=5 // pred_check_branch
      %710 = sbr.rel (%p708) target = $region52
    $region51: #{up_forward.4} parent=5 // pred_region
      %s711 = ssub.s32 %s13, 2
      // Predicated region
      $region53: #{up_forward.4} parent=51 // pred_check
        %p712 = pneg %p152
      $region54: #{up_forward.4} parent=51 // pred_check_branch
        %714 = sbr.rel (%p712) target = $region56
      $region55: #{up_forward.4} parent=51 // pred_region
        %p715 = scmp.lt.s32.totalorder %s19, 1
        %s716 = scalar_select %p715, %s19, 1
        %s717 = smul.addr %s716, 2
        %s718 = smul.addr %s717, 4
        %s719 = scalar_lea.vmem %s5, %s718
      $region56: #{up_forward.4} parent=51 // pred_fallthru
        _
      // Predicated region
      $region57: #{up_forward.4} parent=51 // pred_check
        %p720 = pneg %p178
      $region58: #{up_forward.4} parent=51 // pred_check_branch
        %722 = sbr.rel (%p720) target = $region60
      $region59: #{up_forward.4} parent=51 // pred_region
        %p723 = scmp.lt.s32.totalorder %s19, 1
        %s724 = scalar_select %p723, %s19, 1
        %s725 = smul.addr %s724, 4
        %s726 = scalar_lea.vmem %s6, %s725
      $region60: #{up_forward.4} parent=51 // pred_fallthru
        _
    $region52: #{up_forward.4} parent=5 // pred_fallthru
      _
  $region6: #{up_forward.4} parent=0 // loop_footer
    %s17 = sadd.s32 1, %s13
  $region7: #{up_forward.4} parent=0 // loop_footer_branch
    %12 = sbr.rel target = $region3
  $region8: #{up_forward.4} parent=0 // loop_exit
    _

</llo_original>
